<compile_context>
chip_gen: v6e
topology: v6e:2x2x1
jax: 0.10.0
libtpu: 0.0.40
codegen_flags: <defaults>
</compile_context>

<pallas_src>
import functools
import math

import jax
import jax.numpy as jnp
from jax import lax
from jax.experimental import pallas as pl
from jax.experimental.pallas import tpu as pltpu

FOURIER_DIM = 32      # TimestepEmbedding fourier_dim (even)
TIME_DIM = 32         # MLP hidden / output dim
MAX_PERIOD = 10000

_LANE = 128
_CHUNK = 512          # lane-chunk processed fully in vregs per inner step
_HI = lax.Precision.HIGHEST


def _round_up(a: int, b: int) -> int:
    return ((a + b - 1) // b) * b


def _make_kernel(chunk: int, n_chunks: int, approximate_gelu: bool):
    """Kernel factory closing over static chunking / GELU mode."""

    def kernel(t_ref, freq_ref, w1s_ref, w1c_ref, b1_ref, w2_ref, b2_ref, out_ref):
        # Tiny parameters: load once per grid step, stay in vregs.
        freqs = freq_ref[...]                       # (half, 1)
        w1s = w1s_ref[...]                          # (T, half)   sin-half of W1
        w1c = w1c_ref[...]                          # (T, half)   cos-half of W1
        b1 = b1_ref[...]                            # (T, 1)
        w2 = w2_ref[...]                            # (T, T)      PyTorch (out, in)
        b2 = b2_ref[...]                            # (1, T)

        # Static (fully unrolled) chunk loop: each chunk's intermediates live
        # only within its own straight-line segment -> no VMEM spills.
        for c in range(n_chunks):
            lo = c * chunk
            t = t_ref[:, lo:lo + chunk]             # (1, chunk) timesteps on lanes
            ang = freqs * t                         # (half, chunk) feature-major

            # Fourier embedding folded directly into the first linear:
            #   h = W1[:, :half] @ sin(ang) + W1[:, half:] @ cos(ang) + b1
            h = (jnp.dot(w1s, jnp.sin(ang), precision=_HI,
                         preferred_element_type=jnp.float32)
                 + jnp.dot(w1c, jnp.cos(ang), precision=_HI,
                           preferred_element_type=jnp.float32)
                 + b1)                              # (T, chunk)

            # tanh GELU (EUP) by default; exact erf optional for bit-parity.
            h = jax.nn.gelu(h, approximate=approximate_gelu)

            # Second linear, contracting the feature (sublane) axis of h so the
            # MXU emits the row-major (chunk, T) tile directly — no XLA-side
            # transpose of the full output later.
            #   out[j, o] = sum_t h[t, j] * W2[o, t]
            out = lax.dot_general(
                h, w2,
                dimension_numbers=(((0,), (1,)), ((), ())),
                precision=_HI, preferred_element_type=jnp.float32)  # (chunk, T)

            out_ref[lo:lo + chunk, :] = (out + b2).astype(out_ref.dtype)

    return kernel


def timestep_mlp(x, w1, b1, w2, b2, *, max_period=MAX_PERIOD, row_tile=8192,
                 approximate_gelu=True, out_dtype=jnp.float32,
                 small_n_fallback=0):
    """x: (B, S) timesteps -> (B, S, time_dim).

    Weights are in PyTorch nn.Linear layout:
      w1: (time_dim, fourier_dim), b1: (time_dim,)
      w2: (time_dim, time_dim),    b2: (time_dim,)
    """
    B, S = x.shape
    N = B * S
    time_dim, fourier_dim = w1.shape
    half = fourier_dim // 2

    # For tiny problems the pallas_call + pad/slice glue can't win; optional
    # pure-JAX bypass (disabled by default so the kernel path is exercised).
    if N <= small_n_fallback:
        return reference_timestep_mlp(
            x, w1, b1, w2, b2, max_period=max_period,
            approximate_gelu=approximate_gelu).astype(out_dtype)

    # ---- row tiling: rows live on the lane axis (multiples of 128) ----------
    n_lane = _round_up(max(N, 1), _LANE)
    if n_lane <= _CHUNK:
        n_tile = chunk = n_lane
        grid_n = 1
    else:
        chunk = _CHUNK
        cap = max(chunk, _round_up(row_tile, chunk))
        grid_n = max(2, -(-n_lane // cap))           # >= 2 grid steps ...
        if grid_n % 2:
            grid_n += 1                              # ... and even, for v7x megacore
        n_tile = _round_up(-(-n_lane // grid_n), chunk)
    n_pad = grid_n * n_tile

    # Fourier frequency table (matches the module: exp(arange(half)*-ln(P)/(half-1))).
    freqs = jnp.exp(
        jnp.arange(half, dtype=jnp.float32)
        * (-math.log(max_period) / (half - 1))).reshape(half, 1)

    # Timesteps, feature-major (1, n_pad): rows on lanes, zero-padded tail.
    t_row = jnp.zeros((1, n_pad), jnp.float32).at[0, :N].set(
        x.reshape(-1).astype(jnp.float32))

    kernel = _make_kernel(chunk, n_tile // chunk, approximate_gelu)

    out = pl.pallas_call(
        kernel,
        out_shape=jax.ShapeDtypeStruct((n_pad, time_dim), out_dtype),
        grid=(grid_n,),
        in_specs=[
            pl.BlockSpec((1, n_tile), lambda i: (0, i)),             # streamed timesteps
            pl.BlockSpec((half, 1), lambda i: (0, 0)),               # VMEM-resident params
            pl.BlockSpec((time_dim, half), lambda i: (0, 0)),        # W1 sin-half
            pl.BlockSpec((time_dim, half), lambda i: (0, 0)),        # W1 cos-half
            pl.BlockSpec((time_dim, 1), lambda i: (0, 0)),           # b1
            pl.BlockSpec((time_dim, time_dim), lambda i: (0, 0)),    # W2
            pl.BlockSpec((1, time_dim), lambda i: (0, 0)),           # b2 (row layout)
        ],
        out_specs=pl.BlockSpec((n_tile, time_dim), lambda i: (i, 0)),  # row-major output
        compiler_params=pltpu.CompilerParams(
            dimension_semantics=("parallel",)),                      # v7x TC sharding
    )(t_row, freqs, w1[:, :half], w1[:, half:],
      b1.reshape(time_dim, 1), w2, b2.reshape(1, time_dim))

    # Row-major already: just drop padding and reshape (no transpose pass).
    return out[:N].reshape(B, S, time_dim)


def reference_timestep_mlp(x, w1, b1, w2, b2, *, max_period=MAX_PERIOD,
                           approximate_gelu=True):
    """Pure-JAX reference mirroring the PyTorch module semantics."""
    half = w1.shape[1] // 2
    freqs = jnp.exp(jnp.arange(half, dtype=jnp.float32)
                    * (-math.log(max_period) / (half - 1)))
    ang = x[..., None].astype(jnp.float32) * freqs
    emb = jnp.concatenate([jnp.sin(ang), jnp.cos(ang)], axis=-1)
    h = jnp.dot(emb, w1.T, precision=_HI) + b1
    h = jax.nn.gelu(h, approximate=approximate_gelu)
    return jnp.dot(h, w2.T, precision=_HI) + b2


if __name__ == "__main__":
    key = jax.random.PRNGKey(0)
    k_x, k_w1, k_b1, k_w2, k_b2 = jax.random.split(key, 5)

    B, S = 2, 8
    # Diffusion-style timesteps (arbitrary positive floats).
    x = jax.random.uniform(k_x, (B, S), jnp.float32, minval=0.0, maxval=1000.0)

    # PyTorch nn.Linear default init: U(-1/sqrt(fan_in), +1/sqrt(fan_in)), (out, in) layout.
    bound1 = 1.0 / math.sqrt(FOURIER_DIM)
    w1 = jax.random.uniform(k_w1, (TIME_DIM, FOURIER_DIM), jnp.float32, -bound1, bound1)
    b1 = jax.random.uniform(k_b1, (TIME_DIM,), jnp.float32, -bound1, bound1)
    bound2 = 1.0 / math.sqrt(TIME_DIM)
    w2 = jax.random.uniform(k_w2, (TIME_DIM, TIME_DIM), jnp.float32, -bound2, bound2)
    b2 = jax.random.uniform(k_b2, (TIME_DIM,), jnp.float32, -bound2, bound2)

    # Default (perf) configuration: tanh GELU. Compare against the same-mode reference.
    out = jax.block_until_ready(timestep_mlp(x, w1, b1, w2, b2))
    ref = reference_timestep_mlp(x, w1, b1, w2, b2, approximate_gelu=True)
    assert out.shape == (B, S, TIME_DIM)
    assert jnp.allclose(out, ref, atol=1e-3, rtol=1e-3), "mismatch (tanh GELU) vs. reference"

    # Exact-erf configuration (bit-parity with torch.nn.GELU default semantics).
    out_exact = jax.block_until_ready(
        timestep_mlp(x, w1, b1, w2, b2, approximate_gelu=False))
    ref_exact = reference_timestep_mlp(x, w1, b1, w2, b2, approximate_gelu=False)
    assert jnp.allclose(out_exact, ref_exact, atol=1e-3, rtol=1e-3), \
        "mismatch (exact GELU) vs. reference"

    print("KERNEL_OK")
</pallas_src>

<mosaic_0001>
module attributes {stable_mosaic.version = 11 : i64} {
  func.func @kernel(%arg0: i32, %arg1: memref<1x128xf32, #tpu.memory_space<vmem>>, %arg2: memref<16x1xf32, #tpu.memory_space<vmem>>, %arg3: memref<32x16xf32, #tpu.memory_space<vmem>>, %arg4: memref<32x16xf32, #tpu.memory_space<vmem>>, %arg5: memref<32x1xf32, #tpu.memory_space<vmem>>, %arg6: memref<32x32xf32, #tpu.memory_space<vmem>>, %arg7: memref<1x32xf32, #tpu.memory_space<vmem>>, %arg8: memref<128x32xf32, #tpu.memory_space<vmem>>) attributes {dimension_semantics = [#tpu.dimension_semantics<parallel>], iteration_bounds = array<i64: 1>, scalar_prefetch = 0 : i64, scratch_operands = 0 : i64, tpu.core_type = #tpu.core_type<tc>, window_params = [{transform_indices = @transform_0, window_bounds = array<i64: 1, 128>}, {pipeline_mode = #tpu.pipeline_mode<synchronous>, transform_indices = @transform_1, window_bounds = array<i64: 16, 1>}, {pipeline_mode = #tpu.pipeline_mode<synchronous>, transform_indices = @transform_2, window_bounds = array<i64: 32, 16>}, {pipeline_mode = #tpu.pipeline_mode<synchronous>, transform_indices = @transform_3, window_bounds = array<i64: 32, 16>}, {pipeline_mode = #tpu.pipeline_mode<synchronous>, transform_indices = @transform_4, window_bounds = array<i64: 32, 1>}, {pipeline_mode = #tpu.pipeline_mode<synchronous>, transform_indices = @transform_5, window_bounds = array<i64: 32, 32>}, {pipeline_mode = #tpu.pipeline_mode<synchronous>, transform_indices = @transform_6, window_bounds = array<i64: 1, 32>}, {transform_indices = @transform_7, window_bounds = array<i64: 128, 32>}]} {
    %c0 = arith.constant 0 : index
    %c0_0 = arith.constant 0 : index
    %0 = vector.load %arg2[%c0, %c0_0] : memref<16x1xf32, #tpu.memory_space<vmem>>, vector<16x1xf32>
    %c0_1 = arith.constant 0 : index
    %c0_2 = arith.constant 0 : index
    %1 = vector.load %arg3[%c0_1, %c0_2] : memref<32x16xf32, #tpu.memory_space<vmem>>, vector<32x16xf32>
    %c0_3 = arith.constant 0 : index
    %c0_4 = arith.constant 0 : index
    %2 = vector.load %arg4[%c0_3, %c0_4] : memref<32x16xf32, #tpu.memory_space<vmem>>, vector<32x16xf32>
    %c0_5 = arith.constant 0 : index
    %c0_6 = arith.constant 0 : index
    %3 = vector.load %arg5[%c0_5, %c0_6] : memref<32x1xf32, #tpu.memory_space<vmem>>, vector<32x1xf32>
    %c0_7 = arith.constant 0 : index
    %c0_8 = arith.constant 0 : index
    %4 = vector.load %arg6[%c0_7, %c0_8] : memref<32x32xf32, #tpu.memory_space<vmem>>, vector<32x32xf32>
    %c0_9 = arith.constant 0 : index
    %c0_10 = arith.constant 0 : index
    %5 = vector.load %arg7[%c0_9, %c0_10] : memref<1x32xf32, #tpu.memory_space<vmem>>, vector<1x32xf32>
    %c0_11 = arith.constant 0 : index
    %c0_12 = arith.constant 0 : index
    %6 = vector.load %arg1[%c0_11, %c0_12] : memref<1x128xf32, #tpu.memory_space<vmem>>, vector<1x128xf32>
    %7 = vector.broadcast %0 : vector<16x1xf32> to vector<16x128xf32>
    %8 = vector.broadcast %6 : vector<1x128xf32> to vector<16x128xf32>
    %9 = arith.mulf %7, %8 : vector<16x128xf32>
    %10 = math.sin %9 : vector<16x128xf32>
    %cst = arith.constant dense<0.000000e+00> : vector<32x128xf32>
    %11 = tpu.matmul %1, %10, %cst {dimension_numbers = #tpu.dot_dimension_numbers<[1], [0], [0], [1], [0, 0, 1, 1], [], []>, precision = #tpu.contract_precision<fp32>} : vector<32x16xf32>, vector<16x128xf32>, vector<32x128xf32> -> vector<32x128xf32>
    %12 = math.cos %9 : vector<16x128xf32>
    %cst_13 = arith.constant dense<0.000000e+00> : vector<32x128xf32>
    %13 = tpu.matmul %2, %12, %cst_13 {dimension_numbers = #tpu.dot_dimension_numbers<[1], [0], [0], [1], [0, 0, 1, 1], [], []>, precision = #tpu.contract_precision<fp32>} : vector<32x16xf32>, vector<16x128xf32>, vector<32x128xf32> -> vector<32x128xf32>
    %14 = arith.addf %11, %13 : vector<32x128xf32>
    %15 = vector.broadcast %3 : vector<32x1xf32> to vector<32x128xf32>
    %16 = arith.addf %14, %15 : vector<32x128xf32>
    %17 = arith.mulf %16, %16 : vector<32x128xf32>
    %18 = arith.mulf %16, %17 : vector<32x128xf32>
    %cst_14 = arith.constant 4.471500e-02 : f32
    %19 = vector.broadcast %cst_14 : f32 to vector<32x128xf32>
    %20 = arith.mulf %19, %18 : vector<32x128xf32>
    %21 = arith.addf %16, %20 : vector<32x128xf32>
    %cst_15 = arith.constant 0.797884583 : f32
    %22 = vector.broadcast %cst_15 : f32 to vector<32x128xf32>
    %23 = arith.mulf %22, %21 : vector<32x128xf32>
    %24 = math.tanh %23 : vector<32x128xf32>
    %cst_16 = arith.constant 1.000000e+00 : f32
    %25 = vector.broadcast %cst_16 : f32 to vector<32x128xf32>
    %26 = arith.addf %25, %24 : vector<32x128xf32>
    %cst_17 = arith.constant 5.000000e-01 : f32
    %27 = vector.broadcast %cst_17 : f32 to vector<32x128xf32>
    %28 = arith.mulf %27, %26 : vector<32x128xf32>
    %29 = arith.mulf %16, %28 : vector<32x128xf32>
    %cst_18 = arith.constant dense<0.000000e+00> : vector<128x32xf32>
    %30 = tpu.matmul %29, %4, %cst_18 {dimension_numbers = #tpu.dot_dimension_numbers<[0], [1], [1], [0], [0, 1, 1, 0], [], []>, precision = #tpu.contract_precision<fp32>} : vector<32x128xf32>, vector<32x32xf32>, vector<128x32xf32> -> vector<128x32xf32>
    %31 = vector.broadcast %5 : vector<1x32xf32> to vector<128x32xf32>
    %32 = arith.addf %30, %31 : vector<128x32xf32>
    %c0_19 = arith.constant 0 : index
    %c0_20 = arith.constant 0 : index
    %33 = vector.load %arg8[%c0_19, %c0_20] : memref<128x32xf32, #tpu.memory_space<vmem>>, vector<128x32xf32>
    tpu.vector_store %arg8[%c0_19, %c0_20], %32 {strides = array<i32>} : memref<128x32xf32, #tpu.memory_space<vmem>>, vector<128x32xf32>,
    return
  }
  func.func @transform_0(%arg0: i32) -> (i32, i32) {
    %c0_i32 = arith.constant 0 : i32
    %c0_i32_0 = arith.constant 0 : i32
    return %c0_i32, %arg0 : i32, i32
  }
  func.func @transform_1(%arg0: i32) -> (i32, i32) {
    %c0_i32 = arith.constant 0 : i32
    %c0_i32_0 = arith.constant 0 : i32
    %c0_i32_1 = arith.constant 0 : i32
    return %c0_i32, %c0_i32_0 : i32, i32
  }
  func.func @transform_2(%arg0: i32) -> (i32, i32) {
    %c0_i32 = arith.constant 0 : i32
    %c0_i32_0 = arith.constant 0 : i32
    %c0_i32_1 = arith.constant 0 : i32
    return %c0_i32, %c0_i32_0 : i32, i32
  }
  func.func @transform_3(%arg0: i32) -> (i32, i32) {
    %c0_i32 = arith.constant 0 : i32
    %c0_i32_0 = arith.constant 0 : i32
    %c0_i32_1 = arith.constant 0 : i32
    return %c0_i32, %c0_i32_0 : i32, i32
  }
  func.func @transform_4(%arg0: i32) -> (i32, i32) {
    %c0_i32 = arith.constant 0 : i32
    %c0_i32_0 = arith.constant 0 : i32
    %c0_i32_1 = arith.constant 0 : i32
    return %c0_i32, %c0_i32_0 : i32, i32
  }
  func.func @transform_5(%arg0: i32) -> (i32, i32) {
    %c0_i32 = arith.constant 0 : i32
    %c0_i32_0 = arith.constant 0 : i32
    %c0_i32_1 = arith.constant 0 : i32
    return %c0_i32, %c0_i32_0 : i32, i32
  }
  func.func @transform_6(%arg0: i32) -> (i32, i32) {
    %c0_i32 = arith.constant 0 : i32
    %c0_i32_0 = arith.constant 0 : i32
    %c0_i32_1 = arith.constant 0 : i32
    return %c0_i32, %c0_i32_0 : i32, i32
  }
  func.func @transform_7(%arg0: i32) -> (i32, i32) {
    %c0_i32 = arith.constant 0 : i32
    %c0_i32_0 = arith.constant 0 : i32
    return %arg0, %c0_i32 : i32, i32
  }
}

</mosaic_0001>

<llo_original>
// kernel: tpu_custom_call.1
$region0: #{tpu_custom_call.1}
  #allocation0 [shape = 'u32[]', space=smem, size = 0x4, offset = 0x4, fixed_abs, tag = 'smem constant byte address 0x4 - core index']
  #allocation1 [shape = 'u32[144,128]{1,0:T(1,128)}', space=vmem, size = 0x12000, scoped, tag = 'internal scratch']
  %s0 = inlined_call_operand.vmem [shape: f32[1,128], index: 0, kind: input, shape index: {}]
  %s1 = inlined_call_operand.vmem [shape: f32[16,1], index: 1, kind: input, shape index: {}]
  %s2 = inlined_call_operand.vmem [shape: f32[32,16], index: 2, kind: input, shape index: {}]
  %s3 = inlined_call_operand.vmem [shape: f32[32,16], index: 3, kind: input, shape index: {}]
  %s4 = inlined_call_operand.vmem [shape: f32[32,1], index: 4, kind: input, shape index: {}]
  %s5 = inlined_call_operand.vmem [shape: f32[32,32], index: 5, kind: input, shape index: {}]
  %s6 = inlined_call_operand.vmem [shape: f32[1,32], index: 6, kind: input, shape index: {}]
  %s7 = inlined_call_operand.vmem [shape: f32[128,32], index: 7, kind: output, shape index: {}]
  %s8 = sld [smem:[#allocation0]]
  $region38: #{tpu_custom_call.1} parent=0
    _
  %s10 = ssub.s32 1, %s8
  %s11 = scalar_select 0, %s10, %s8
  // Predicated region
  $region2: #{tpu_custom_call.1} parent=0 // pred_check
    _
  $region3: #{tpu_custom_call.1} parent=0 // pred_check_branch
    %13 = sbr.rel (0) target = $region5
  $region4: #{tpu_custom_call.1} parent=0 // pred_region
    _
  $region5: #{tpu_custom_call.1} parent=0 // pred_fallthru
    _
  // Predicated region
  $region6: #{tpu_custom_call.1} parent=0 // pred_check
    _
  $region7: #{tpu_custom_call.1} parent=0 // pred_check_branch
    %15 = sbr.rel (0) target = $region9
  $region8: #{tpu_custom_call.1} parent=0 // pred_region
    _
  $region9: #{tpu_custom_call.1} parent=0 // pred_fallthru
    _
  // Predicated region
  $region10: #{tpu_custom_call.1} parent=0 // pred_check
    _
  $region11: #{tpu_custom_call.1} parent=0 // pred_check_branch
    %17 = sbr.rel (0) target = $region13
  $region12: #{tpu_custom_call.1} parent=0 // pred_region
    _
  $region13: #{tpu_custom_call.1} parent=0 // pred_fallthru
    _
  // Predicated region
  $region14: #{tpu_custom_call.1} parent=0 // pred_check
    _
  $region15: #{tpu_custom_call.1} parent=0 // pred_check_branch
    %19 = sbr.rel (0) target = $region17
  $region16: #{tpu_custom_call.1} parent=0 // pred_region
    _
  $region17: #{tpu_custom_call.1} parent=0 // pred_fallthru
    _
  // Predicated region
  $region18: #{tpu_custom_call.1} parent=0 // pred_check
    _
  $region19: #{tpu_custom_call.1} parent=0 // pred_check_branch
    %21 = sbr.rel (0) target = $region21
  $region20: #{tpu_custom_call.1} parent=0 // pred_region
    _
  $region21: #{tpu_custom_call.1} parent=0 // pred_fallthru
    _
  // Predicated region
  $region22: #{tpu_custom_call.1} parent=0 // pred_check
    _
  $region23: #{tpu_custom_call.1} parent=0 // pred_check_branch
    %23 = sbr.rel (0) target = $region25
  $region24: #{tpu_custom_call.1} parent=0 // pred_region
    _
  $region25: #{tpu_custom_call.1} parent=0 // pred_fallthru
    _
  // Predicated region
  $region26: #{tpu_custom_call.1} parent=0 // pred_check
    _
  $region27: #{tpu_custom_call.1} parent=0 // pred_check_branch
    %25 = sbr.rel (0) target = $region29
  $region28: #{tpu_custom_call.1} parent=0 // pred_region
    _
  $region29: #{tpu_custom_call.1} parent=0 // pred_fallthru
    _
  %v26 = vld [vmem:[%s1] sm:$0xff]
  %v27 = vld [vmem:[%s1 + $0x8] sm:$0xff]
  %v28 = vld [vmem:[%s2] sm:$0xff]
  %v29 = vld [vmem:[%s2 + $0x8] sm:$0xff]
  %v30 = vld [vmem:[%s2 + $0x10] sm:$0xff]
  %v31 = vld [vmem:[%s2 + $0x18] sm:$0xff]
  %v32 = vld [vmem:[%s3] sm:$0xff]
  %v33 = vld [vmem:[%s3 + $0x8] sm:$0xff]
  %v34 = vld [vmem:[%s3 + $0x10] sm:$0xff]
  %v35 = vld [vmem:[%s3 + $0x18] sm:$0xff]
  %v36 = vld [vmem:[%s4] sm:$0xff]
  %v37 = vld [vmem:[%s4 + $0x8] sm:$0xff]
  %v38 = vld [vmem:[%s4 + $0x10] sm:$0xff]
  %v39 = vld [vmem:[%s4 + $0x18] sm:$0xff]
  %v40 = vld [vmem:[%s5] sm:$0xff]
  %v41 = vld [vmem:[%s5 + $0x8] sm:$0xff]
  %v42 = vld [vmem:[%s5 + $0x10] sm:$0xff]
  %v43 = vld [vmem:[%s5 + $0x18] sm:$0xff]
  %v44 = vld [vmem:[%s6] sm:$0x1]
  %v45 = vld [vmem:[%s0] sm:$0x1]
  %47 = vset.pattern.permute.xlu0 0
  %48 = vperm.xlu0 %47, %v26
  %v49 = vpop.permute.xlu0 %48
  %52 = vset.pattern.permute.xlu0 0
  %53 = vperm.xlu0 %52, %v27
  %v54 = vpop.permute.xlu0 %53
  %v57 = vlaneseq
  %v58 = vshrl.u32 %v57, 7
  %v59 = vsub.s32 0, %v58
  %v60 = vrot.slane %v45, %v59
  %v62 = vmul.f32 %v49, %v60
  %v63 = vmul.f32 %v54, %v60
  %v64 = vand.u32 2147483647, %v62
  %vm65 = vcmp.le.f32.partialorder %v64, 0.7853982
  %vm66 = vcmp.lt.s32.totalorder %v62, 0
  %v67 = vand.u32 %v62, 2139095040
  %v68 = vshrl.u32 %v67, 23
  %v69 = vsub.s32 %v68, 127
  %v70 = vand.u32 2147483647, %v62
  %v71 = vand.u32 %v70, 8388607
  %v72 = vor.u32 %v71, 8388608
  %v73 = vsub.s32 0, %v72
  %v74 = vadd.s32 %v69, 1
  %vm75 = vcmp.gt.s32.totalorder %v74, 0
  %v76 = vsel %vm75, %v74, 0
  %v77 = vshrl.u32 %v76, 5
  %v78 = vand.u32 %v76, 31
  %v79 = vsub.s32 32, %v78
  %v80 = vshrl.u32 683565275, %v79
  %v81 = vshll.u32 683565275, %v78
  %v82 = vshrl.u32 2475754826, %v79
  %v83 = vor.u32 %v81, %v82
  %v84 = vshll.u32 2475754826, %v78
  %v85 = vshrl.u32 2131351028, %v79
  %v86 = vor.u32 %v84, %v85
  %v87 = vshll.u32 2131351028, %v78
  %v88 = vshrl.u32 2102212464, %v79
  %v89 = vor.u32 %v87, %v88
  %v90 = vshll.u32 2102212464, %v78
  %v91 = vshrl.u32 920167782, %v79
  %v92 = vor.u32 %v90, %v91
  %v93 = vshll.u32 920167782, %v78
  %v94 = vshrl.u32 1326507024, %v79
  %v95 = vor.u32 %v93, %v94
  %vm96 = vcmp.lt.s32.totalorder %v77, 1
  %vm97 = vcmp.lt.s32.totalorder %v77, 2
  %vm98 = vcmp.lt.s32.totalorder %v77, 3
  %vm99 = vcmp.lt.s32.totalorder %v77, 4
  %v100 = vsel %vm96, %v80, %v83
  %v101 = vsel %vm99, %v89, 2102212464
  %v102 = vsel %vm98, %v86, %v101
  %v103 = vsel %vm97, %v100, %v102
  %v104 = vsel %vm96, %v83, %v86
  %v105 = vsel %vm99, %v92, 920167782
  %v106 = vsel %vm98, %v89, %v105
  %v107 = vsel %vm97, %v104, %v106
  %v108 = vsel %vm96, %v86, %v89
  %v109 = vsel %vm99, %v95, 1326507024
  %v110 = vsel %vm98, %v92, %v109
  %v111 = vsel %vm97, %v108, %v110
  %v112 = vshll.u32 %v72, 8
  %v113 = vmul.u32.u64.compose %v112, %v111
  %v114 = vextract.low.u32 %v113
  %v115 = vextract.high.u32 %v113
  %v116 = vmul.u32.u64.compose %v112, %v107
  %v117 = vextract.low.u32 %v116
  %v118 = vextract.high.u32 %v116
  %v119 = vmul.u32 %v112, %v103
  %v120 = vadd.s32 %v115, %v117
  %vm121 = vc.u32 %v115, %v117
  %v122 = vadd.s32 %v118, 1
  %v123 = vsel %vm121, %v122, %v118
  %v124 = vadd.s32 %v119, %v123
  %v125 = vadd.s32 %v124, 536870912
  %v126 = vshrl.u32 %v125, 30
  %v127 = vshll.u32 %v126, 30
  %v128 = vsub.s32 %v124, %v127
  %vm129 = vcmp.lt.s32.totalorder %v128, 0
  %v130 = vsub.s32 0, %v128
  %v131 = vsel %vm129, %v130, %v128
  %v132 = vclz %v131
  %v133 = vsub.s32 %v132, 2
  %vm134 = vcmp.gt.s32.totalorder 0, %v133
  %v135 = vsel %vm134, 0, %v133
  %v136 = vsub.s32 32, %v135
  %v137 = vshll.u32 %v128, %v135
  %v138 = vshrl.u32 %v120, %v136
  %v139 = vor.u32 %v137, %v138
  %v140 = vsub.s32 4294967266, %v135
  %v141 = vadd.s32 %v140, 127
  %v142 = vshll.u32 %v141, 23
  %v143 = vor.u32 4788187, %v142
  %v144 = vand.u32 2147483647, %v143
  %v146 = vcvt.s32.f32 %v139
  %v147 = vmul.f32 %v146, %v144
  %v148 = vxor.u32 %v147, 2147483648
  %v149 = vsel %vm66, %v148, %v147
  %v150 = vsub.s32 4, %v126
  %v151 = vsel %vm66, %v150, %v126
  %v152 = vsel %vm65, %v62, %v149
  %v153 = vsel %vm65, 0, %v151
  %v154 = vcosq.f32.pop %v152
  %v155 = vsinq.f32.pop %v152
  %vm156 = vweird.f32 %v62
  %v157 = vadd.s32 %v153, 3
  %v158 = vand.u32 %v157, 3
  %vm159 = vcmp.lt.s32.totalorder %v158, 2
  %vm160 = vcmp.eq.s32.totalorder %v158, 0
  %v161 = vxor.u32 %v155, 2147483648
  %v162 = vsel %vm160, %v154, %v161
  %vm163 = vcmp.eq.s32.totalorder %v158, 2
  %v164 = vxor.u32 %v154, 2147483648
  %v165 = vsel %vm163, %v164, %v155
  %v166 = vsel %vm159, %v162, %v165
  %v167 = vsel %vm156, nan, %v166
  %v168 = vand.u32 2147483647, %v63
  %vm169 = vcmp.le.f32.partialorder %v168, 0.7853982
  %vm170 = vcmp.lt.s32.totalorder %v63, 0
  %v171 = vand.u32 %v63, 2139095040
  %v172 = vshrl.u32 %v171, 23
  %v173 = vsub.s32 %v172, 127
  %v174 = vand.u32 2147483647, %v63
  %v175 = vand.u32 %v174, 8388607
  %v176 = vor.u32 %v175, 8388608
  %v177 = vsub.s32 0, %v176
  %v178 = vadd.s32 %v173, 1
  %vm179 = vcmp.gt.s32.totalorder %v178, 0
  %v180 = vsel %vm179, %v178, 0
  %v181 = vshrl.u32 %v180, 5
  %v182 = vand.u32 %v180, 31
  %v183 = vsub.s32 32, %v182
  %v184 = vshrl.u32 683565275, %v183
  %v185 = vshll.u32 683565275, %v182
  %v186 = vshrl.u32 2475754826, %v183
  %v187 = vor.u32 %v185, %v186
  %v188 = vshll.u32 2475754826, %v182
  %v189 = vshrl.u32 2131351028, %v183
  %v190 = vor.u32 %v188, %v189
  %v191 = vshll.u32 2131351028, %v182
  %v192 = vshrl.u32 2102212464, %v183
  %v193 = vor.u32 %v191, %v192
  %v194 = vshll.u32 2102212464, %v182
  %v195 = vshrl.u32 920167782, %v183
  %v196 = vor.u32 %v194, %v195
  %v197 = vshll.u32 920167782, %v182
  %v198 = vshrl.u32 1326507024, %v183
  %v199 = vor.u32 %v197, %v198
  %vm200 = vcmp.lt.s32.totalorder %v181, 1
  %vm201 = vcmp.lt.s32.totalorder %v181, 2
  %vm202 = vcmp.lt.s32.totalorder %v181, 3
  %vm203 = vcmp.lt.s32.totalorder %v181, 4
  %v204 = vsel %vm200, %v184, %v187
  %v205 = vsel %vm203, %v193, 2102212464
  %v206 = vsel %vm202, %v190, %v205
  %v207 = vsel %vm201, %v204, %v206
  %v208 = vsel %vm200, %v187, %v190
  %v209 = vsel %vm203, %v196, 920167782
  %v210 = vsel %vm202, %v193, %v209
  %v211 = vsel %vm201, %v208, %v210
  %v212 = vsel %vm200, %v190, %v193
  %v213 = vsel %vm203, %v199, 1326507024
  %v214 = vsel %vm202, %v196, %v213
  %v215 = vsel %vm201, %v212, %v214
  %v216 = vshll.u32 %v176, 8
  %v217 = vmul.u32.u64.compose %v216, %v215
  %v218 = vextract.low.u32 %v217
  %v219 = vextract.high.u32 %v217
  %v220 = vmul.u32.u64.compose %v216, %v211
  %v221 = vextract.low.u32 %v220
  %v222 = vextract.high.u32 %v220
  %v223 = vmul.u32 %v216, %v207
  %v224 = vadd.s32 %v219, %v221
  %vm225 = vc.u32 %v219, %v221
  %v226 = vadd.s32 %v222, 1
  %v227 = vsel %vm225, %v226, %v222
  %v228 = vadd.s32 %v223, %v227
  %v229 = vadd.s32 %v228, 536870912
  %v230 = vshrl.u32 %v229, 30
  %v231 = vshll.u32 %v230, 30
  %v232 = vsub.s32 %v228, %v231
  %vm233 = vcmp.lt.s32.totalorder %v232, 0
  %v234 = vsub.s32 0, %v232
  %v235 = vsel %vm233, %v234, %v232
  %v236 = vclz %v235
  %v237 = vsub.s32 %v236, 2
  %vm238 = vcmp.gt.s32.totalorder 0, %v237
  %v239 = vsel %vm238, 0, %v237
  %v240 = vsub.s32 32, %v239
  %v241 = vshll.u32 %v232, %v239
  %v242 = vshrl.u32 %v224, %v240
  %v243 = vor.u32 %v241, %v242
  %v244 = vsub.s32 4294967266, %v239
  %v245 = vadd.s32 %v244, 127
  %v246 = vshll.u32 %v245, 23
  %v247 = vor.u32 4788187, %v246
  %v248 = vand.u32 2147483647, %v247
  %v250 = vcvt.s32.f32 %v243
  %v251 = vmul.f32 %v250, %v248
  %v252 = vxor.u32 %v251, 2147483648
  %v253 = vsel %vm170, %v252, %v251
  %v254 = vsub.s32 4, %v230
  %v255 = vsel %vm170, %v254, %v230
  %v256 = vsel %vm169, %v63, %v253
  %v257 = vsel %vm169, 0, %v255
  %v258 = vcosq.f32.pop %v256
  %v259 = vsinq.f32.pop %v256
  %vm260 = vweird.f32 %v63
  %v261 = vadd.s32 %v257, 3
  %v262 = vand.u32 %v261, 3
  %vm263 = vcmp.lt.s32.totalorder %v262, 2
  %vm264 = vcmp.eq.s32.totalorder %v262, 0
  %v265 = vxor.u32 %v259, 2147483648
  %v266 = vsel %vm264, %v258, %v265
  %vm267 = vcmp.eq.s32.totalorder %v262, 2
  %v268 = vxor.u32 %v258, 2147483648
  %v269 = vsel %vm267, %v268, %v259
  %v270 = vsel %vm263, %v266, %v269
  %v271 = vsel %vm260, nan, %v270
  %v272 = vand.u32 2147483647, %v62
  %vm273 = vcmp.le.f32.partialorder %v272, 0.7853982
  %vm274 = vcmp.lt.s32.totalorder %v62, 0
  %v275 = vand.u32 %v62, 2139095040
  %v276 = vshrl.u32 %v275, 23
  %v277 = vsub.s32 %v276, 127
  %v278 = vand.u32 2147483647, %v62
  %v279 = vand.u32 %v278, 8388607
  %v280 = vor.u32 %v279, 8388608
  %v281 = vsub.s32 0, %v280
  %v282 = vadd.s32 %v277, 1
  %vm283 = vcmp.gt.s32.totalorder %v282, 0
  %v284 = vsel %vm283, %v282, 0
  %v285 = vshrl.u32 %v284, 5
  %v286 = vand.u32 %v284, 31
  %v287 = vsub.s32 32, %v286
  %v288 = vshrl.u32 683565275, %v287
  %v289 = vshll.u32 683565275, %v286
  %v290 = vshrl.u32 2475754826, %v287
  %v291 = vor.u32 %v289, %v290
  %v292 = vshll.u32 2475754826, %v286
  %v293 = vshrl.u32 2131351028, %v287
  %v294 = vor.u32 %v292, %v293
  %v295 = vshll.u32 2131351028, %v286
  %v296 = vshrl.u32 2102212464, %v287
  %v297 = vor.u32 %v295, %v296
  %v298 = vshll.u32 2102212464, %v286
  %v299 = vshrl.u32 920167782, %v287
  %v300 = vor.u32 %v298, %v299
  %v301 = vshll.u32 920167782, %v286
  %v302 = vshrl.u32 1326507024, %v287
  %v303 = vor.u32 %v301, %v302
  %vm304 = vcmp.lt.s32.totalorder %v285, 1
  %vm305 = vcmp.lt.s32.totalorder %v285, 2
  %vm306 = vcmp.lt.s32.totalorder %v285, 3
  %vm307 = vcmp.lt.s32.totalorder %v285, 4
  %v308 = vsel %vm304, %v288, %v291
  %v309 = vsel %vm307, %v297, 2102212464
  %v310 = vsel %vm306, %v294, %v309
  %v311 = vsel %vm305, %v308, %v310
  %v312 = vsel %vm304, %v291, %v294
  %v313 = vsel %vm307, %v300, 920167782
  %v314 = vsel %vm306, %v297, %v313
  %v315 = vsel %vm305, %v312, %v314
  %v316 = vsel %vm304, %v294, %v297
  %v317 = vsel %vm307, %v303, 1326507024
  %v318 = vsel %vm306, %v300, %v317
  %v319 = vsel %vm305, %v316, %v318
  %v320 = vshll.u32 %v280, 8
  %v321 = vmul.u32.u64.compose %v320, %v319
  %v322 = vextract.low.u32 %v321
  %v323 = vextract.high.u32 %v321
  %v324 = vmul.u32.u64.compose %v320, %v315
  %v325 = vextract.low.u32 %v324
  %v326 = vextract.high.u32 %v324
  %v327 = vmul.u32 %v320, %v311
  %v328 = vadd.s32 %v323, %v325
  %vm329 = vc.u32 %v323, %v325
  %v330 = vadd.s32 %v326, 1
  %v331 = vsel %vm329, %v330, %v326
  %v332 = vadd.s32 %v327, %v331
  %v333 = vadd.s32 %v332, 536870912
  %v334 = vshrl.u32 %v333, 30
  %v335 = vshll.u32 %v334, 30
  %v336 = vsub.s32 %v332, %v335
  %vm337 = vcmp.lt.s32.totalorder %v336, 0
  %v338 = vsub.s32 0, %v336
  %v339 = vsel %vm337, %v338, %v336
  %v340 = vclz %v339
  %v341 = vsub.s32 %v340, 2
  %vm342 = vcmp.gt.s32.totalorder 0, %v341
  %v343 = vsel %vm342, 0, %v341
  %v344 = vsub.s32 32, %v343
  %v345 = vshll.u32 %v336, %v343
  %v346 = vshrl.u32 %v328, %v344
  %v347 = vor.u32 %v345, %v346
  %v348 = vsub.s32 4294967266, %v343
  %v349 = vadd.s32 %v348, 127
  %v350 = vshll.u32 %v349, 23
  %v351 = vor.u32 4788187, %v350
  %v352 = vand.u32 2147483647, %v351
  %v354 = vcvt.s32.f32 %v347
  %v355 = vmul.f32 %v354, %v352
  %v356 = vxor.u32 %v355, 2147483648
  %v357 = vsel %vm274, %v356, %v355
  %v358 = vsub.s32 4, %v334
  %v359 = vsel %vm274, %v358, %v334
  %v360 = vsel %vm273, %v62, %v357
  %v361 = vsel %vm273, 0, %v359
  %v362 = vcosq.f32.pop %v360
  %v363 = vsinq.f32.pop %v360
  %vm364 = vweird.f32 %v62
  %v365 = vand.u32 %v361, 3
  %vm366 = vcmp.lt.s32.totalorder %v365, 2
  %vm367 = vcmp.eq.s32.totalorder %v365, 0
  %v368 = vxor.u32 %v363, 2147483648
  %v369 = vsel %vm367, %v362, %v368
  %vm370 = vcmp.eq.s32.totalorder %v365, 2
  %v371 = vxor.u32 %v362, 2147483648
  %v372 = vsel %vm370, %v371, %v363
  %v373 = vsel %vm366, %v369, %v372
  %v374 = vsel %vm364, nan, %v373
  %v375 = vand.u32 2147483647, %v63
  %vm376 = vcmp.le.f32.partialorder %v375, 0.7853982
  %vm377 = vcmp.lt.s32.totalorder %v63, 0
  %v378 = vand.u32 %v63, 2139095040
  %v379 = vshrl.u32 %v378, 23
  %v380 = vsub.s32 %v379, 127
  %v381 = vand.u32 2147483647, %v63
  %v382 = vand.u32 %v381, 8388607
  %v383 = vor.u32 %v382, 8388608
  %v384 = vsub.s32 0, %v383
  %v385 = vadd.s32 %v380, 1
  %vm386 = vcmp.gt.s32.totalorder %v385, 0
  %v387 = vsel %vm386, %v385, 0
  %v388 = vshrl.u32 %v387, 5
  %v389 = vand.u32 %v387, 31
  %v390 = vsub.s32 32, %v389
  %v391 = vshrl.u32 683565275, %v390
  %v392 = vshll.u32 683565275, %v389
  %v393 = vshrl.u32 2475754826, %v390
  %v394 = vor.u32 %v392, %v393
  %v395 = vshll.u32 2475754826, %v389
  %v396 = vshrl.u32 2131351028, %v390
  %v397 = vor.u32 %v395, %v396
  %v398 = vshll.u32 2131351028, %v389
  %v399 = vshrl.u32 2102212464, %v390
  %v400 = vor.u32 %v398, %v399
  %v401 = vshll.u32 2102212464, %v389
  %v402 = vshrl.u32 920167782, %v390
  %v403 = vor.u32 %v401, %v402
  %v404 = vshll.u32 920167782, %v389
  %v405 = vshrl.u32 1326507024, %v390
  %v406 = vor.u32 %v404, %v405
  %vm407 = vcmp.lt.s32.totalorder %v388, 1
  %vm408 = vcmp.lt.s32.totalorder %v388, 2
  %vm409 = vcmp.lt.s32.totalorder %v388, 3
  %vm410 = vcmp.lt.s32.totalorder %v388, 4
  %v411 = vsel %vm407, %v391, %v394
  %v412 = vsel %vm410, %v400, 2102212464
  %v413 = vsel %vm409, %v397, %v412
  %v414 = vsel %vm408, %v411, %v413
  %v415 = vsel %vm407, %v394, %v397
  %v416 = vsel %vm410, %v403, 920167782
  %v417 = vsel %vm409, %v400, %v416
  %v418 = vsel %vm408, %v415, %v417
  %v419 = vsel %vm407, %v397, %v400
  %v420 = vsel %vm410, %v406, 1326507024
  %v421 = vsel %vm409, %v403, %v420
  %v422 = vsel %vm408, %v419, %v421
  %v423 = vshll.u32 %v383, 8
  %v424 = vmul.u32.u64.compose %v423, %v422
  %v425 = vextract.low.u32 %v424
  %v426 = vextract.high.u32 %v424
  %v427 = vmul.u32.u64.compose %v423, %v418
  %v428 = vextract.low.u32 %v427
  %v429 = vextract.high.u32 %v427
  %v430 = vmul.u32 %v423, %v414
  %v431 = vadd.s32 %v426, %v428
  %vm432 = vc.u32 %v426, %v428
  %v433 = vadd.s32 %v429, 1
  %v434 = vsel %vm432, %v433, %v429
  %v435 = vadd.s32 %v430, %v434
  %v436 = vadd.s32 %v435, 536870912
  %v437 = vshrl.u32 %v436, 30
  %v438 = vshll.u32 %v437, 30
  %v439 = vsub.s32 %v435, %v438
  %vm440 = vcmp.lt.s32.totalorder %v439, 0
  %v441 = vsub.s32 0, %v439
  %v442 = vsel %vm440, %v441, %v439
  %v443 = vclz %v442
  %v444 = vsub.s32 %v443, 2
  %vm445 = vcmp.gt.s32.totalorder 0, %v444
  %v446 = vsel %vm445, 0, %v444
  %v447 = vsub.s32 32, %v446
  %v448 = vshll.u32 %v439, %v446
  %v449 = vshrl.u32 %v431, %v447
  %v450 = vor.u32 %v448, %v449
  %v451 = vsub.s32 4294967266, %v446
  %v452 = vadd.s32 %v451, 127
  %v453 = vshll.u32 %v452, 23
  %v454 = vor.u32 4788187, %v453
  %v455 = vand.u32 2147483647, %v454
  %v457 = vcvt.s32.f32 %v450
  %v458 = vmul.f32 %v457, %v455
  %v459 = vxor.u32 %v458, 2147483648
  %v460 = vsel %vm377, %v459, %v458
  %v461 = vsub.s32 4, %v437
  %v462 = vsel %vm377, %v461, %v437
  %v463 = vsel %vm376, %v63, %v460
  %v464 = vsel %vm376, 0, %v462
  %v465 = vcosq.f32.pop %v463
  %v466 = vsinq.f32.pop %v463
  %vm467 = vweird.f32 %v63
  %v468 = vand.u32 %v464, 3
  %vm469 = vcmp.lt.s32.totalorder %v468, 2
  %vm470 = vcmp.eq.s32.totalorder %v468, 0
  %v471 = vxor.u32 %v466, 2147483648
  %v472 = vsel %vm470, %v465, %v471
  %vm473 = vcmp.eq.s32.totalorder %v468, 2
  %v474 = vxor.u32 %v465, 2147483648
  %v475 = vsel %vm473, %v474, %v466
  %v476 = vsel %vm469, %v472, %v475
  %v477 = vsel %vm467, nan, %v476
  %vm478 = vcmask 130048
  %v480 = vsel %vm478, %v32, 0
  %v483 = vsel %vm478, %v33, 0
  %v486 = vsel %vm478, %v34, 0
  %v489 = vsel %vm478, %v35, 0
  %491 = vmatprep.subr.mxu0 0.0
  %492 = vmatpush1.msra.mxu0 0.0
  %493 = vmatprep.subr.mxu0 0.0
  %494 = vmatpush1.msra.mxu0 0.0
  %495 = vmatprep.subr.mxu0 0.0
  %496 = vmatpush1.msra.mxu0 0.0
  %497 = vmatprep.subr.mxu0 0.0
  %498 = vmatpush1.msra.mxu0 0.0
  %499 = vmatprep.subr.mxu0 0.0
  %500 = vmatpush1.msra.mxu0 0.0
  %501 = vmatprep.subr.mxu0 0.0
  %502 = vmatpush1.msra.mxu0 0.0
  %503 = vmatprep.subr.mxu0 0.0
  %504 = vmatpush1.msra.mxu0 0.0
  %505 = vmatprep.subr.mxu0 0.0
  %506 = vmatpush1.msra.mxu0 0.0
  %507 = vmatprep.subr.mxu0 0.0
  %508 = vmatpush1.msra.mxu0 0.0
  %509 = vmatprep.subr.mxu0 0.0
  %510 = vmatpush1.msra.mxu0 0.0
  %511 = vmatprep.subr.mxu0 0.0
  %512 = vmatpush1.msra.mxu0 0.0
  %513 = vmatprep.subr.mxu0 0.0
  %514 = vmatpush1.msra.mxu0 0.0
  %515 = vmatprep.subr.mxu0 0.0
  %516 = vmatpush1.msra.mxu0 0.0
  %517 = vmatprep.subr.mxu0 0.0
  %518 = vmatpush1.msra.mxu0 0.0
  %519 = vmatprep.subr.mxu0 0.0
  %v520 = vand.u32 %v477, 4294901760
  %521 = vmatpush1.msra.mxu0 %v520
  %522 = vmatprep.subr.mxu0 0.0
  %v523 = vand.u32 %v374, 4294901760
  %524 = vmatpush1.msra.mxu0 %v523
  %525 = vmatprep.subr.mxu0 0.0
  %526 = vmatpush2.msra.mxu0 0.0
  %527 = vmatprep.subr.mxu0 0.0
  %528 = vmatpush2.msra.mxu0 0.0
  %529 = vmatprep.subr.mxu0 0.0
  %530 = vmatpush2.msra.mxu0 0.0
  %531 = vmatprep.subr.mxu0 0.0
  %532 = vmatpush2.msra.mxu0 0.0
  %533 = vmatprep.subr.mxu0 0.0
  %534 = vmatpush2.msra.mxu0 0.0
  %535 = vmatprep.subr.mxu0 0.0
  %536 = vmatpush2.msra.mxu0 0.0
  %537 = vmatprep.subr.mxu0 0.0
  %538 = vmatpush2.msra.mxu0 0.0
  %539 = vmatprep.subr.mxu0 0.0
  %540 = vmatpush2.msra.mxu0 0.0
  %541 = vmatprep.subr.mxu0 0.0
  %542 = vmatpush2.msra.mxu0 0.0
  %543 = vmatprep.subr.mxu0 0.0
  %544 = vmatpush2.msra.mxu0 0.0
  %545 = vmatprep.subr.mxu0 0.0
  %546 = vmatpush2.msra.mxu0 0.0
  %547 = vmatprep.subr.mxu0 0.0
  %548 = vmatpush2.msra.mxu0 0.0
  %549 = vmatprep.subr.mxu0 0.0
  %550 = vmatpush2.msra.mxu0 0.0
  %551 = vmatprep.subr.mxu0 0.0
  %552 = vmatpush2.msra.mxu0 0.0
  %553 = vmatprep.subr.mxu0 0.0
  %554 = vmatpush2.msra.mxu0 0.0
  %555 = vmatprep.subr.mxu0 0.0
  %556 = vmatpush2.msra.mxu0 0.0
  %557 = vmatprep.mubr.f32.mxu0 0.0
  %v558 = vand.u32 %v480, 4294901760
  %v559 = vsub.f32 %v480, %v558
  %v560 = vand.u32 %v559, 4294901760
  %v561 = vsub.f32 %v559, %v560
  %v562 = vand.u32 %v561, 4294901760
  %563 = vmatmul.mubr.f32.gmra.mxu0 %v562
  %v564 = vpop.f32.mrf.mxu0
  %v565 = vadd.f32 0.0, %v564
  %v566 = vpop.f32.mrf.mxu0
  %567 = vmatprep.mubr.f32.mxu0 0.0
  %v568 = vand.u32 %v483, 4294901760
  %v569 = vsub.f32 %v483, %v568
  %v570 = vand.u32 %v569, 4294901760
  %v571 = vsub.f32 %v569, %v570
  %v572 = vand.u32 %v571, 4294901760
  %573 = vmatmul.mubr.f32.gmra.mxu0 %v572
  %v574 = vpop.f32.mrf.mxu0
  %v575 = vadd.f32 0.0, %v574
  %v576 = vpop.f32.mrf.mxu0
  %577 = vmatprep.mubr.f32.mxu0 0.0
  %v578 = vand.u32 %v486, 4294901760
  %v579 = vsub.f32 %v486, %v578
  %v580 = vand.u32 %v579, 4294901760
  %v581 = vsub.f32 %v579, %v580
  %v582 = vand.u32 %v581, 4294901760
  %583 = vmatmul.mubr.f32.gmra.mxu0 %v582
  %v584 = vpop.f32.mrf.mxu0
  %v585 = vadd.f32 0.0, %v584
  %v586 = vpop.f32.mrf.mxu0
  %587 = vmatprep.mubr.f32.mxu0 0.0
  %v588 = vand.u32 %v489, 4294901760
  %v589 = vsub.f32 %v489, %v588
  %v590 = vand.u32 %v589, 4294901760
  %v591 = vsub.f32 %v589, %v590
  %v592 = vand.u32 %v591, 4294901760
  %593 = vmatmul.mubr.f32.gmra.mxu0 %v592
  %v594 = vpop.f32.mrf.mxu0
  %v595 = vadd.f32 0.0, %v594
  %v596 = vpop.f32.mrf.mxu0
  %597 = vdwg.mxu0
  %598 = vmatprep.subr.mxu0 0.0
  %599 = vmatpush1.msra.mxu0 0.0
  %600 = vmatprep.subr.mxu0 0.0
  %601 = vmatpush1.msra.mxu0 0.0
  %602 = vmatprep.subr.mxu0 0.0
  %603 = vmatpush1.msra.mxu0 0.0
  %604 = vmatprep.subr.mxu0 0.0
  %605 = vmatpush1.msra.mxu0 0.0
  %606 = vmatprep.subr.mxu0 0.0
  %607 = vmatpush1.msra.mxu0 0.0
  %608 = vmatprep.subr.mxu0 0.0
  %609 = vmatpush1.msra.mxu0 0.0
  %610 = vmatprep.subr.mxu0 0.0
  %611 = vmatpush1.msra.mxu0 0.0
  %612 = vmatprep.subr.mxu0 0.0
  %613 = vmatpush1.msra.mxu0 0.0
  %614 = vmatprep.subr.mxu0 0.0
  %615 = vmatpush1.msra.mxu0 0.0
  %616 = vmatprep.subr.mxu0 0.0
  %617 = vmatpush1.msra.mxu0 0.0
  %618 = vmatprep.subr.mxu0 0.0
  %619 = vmatpush1.msra.mxu0 0.0
  %620 = vmatprep.subr.mxu0 0.0
  %621 = vmatpush1.msra.mxu0 0.0
  %622 = vmatprep.subr.mxu0 0.0
  %623 = vmatpush1.msra.mxu0 0.0
  %624 = vmatprep.subr.mxu0 0.0
  %625 = vmatpush1.msra.mxu0 0.0
  %626 = vmatprep.subr.mxu0 0.0
  %v627 = vand.u32 %v477, 4294901760
  %v628 = vsub.f32 %v477, %v627
  %v629 = vand.u32 %v628, 4294901760
  %v630 = vsub.f32 %v628, %v629
  %v631 = vand.u32 %v630, 4294901760
  %632 = vmatpush1.msra.mxu0 %v631
  %633 = vmatprep.subr.mxu0 0.0
  %v634 = vand.u32 %v374, 4294901760
  %v635 = vsub.f32 %v374, %v634
  %v636 = vand.u32 %v635, 4294901760
  %v637 = vsub.f32 %v635, %v636
  %v638 = vand.u32 %v637, 4294901760
  %639 = vmatpush1.msra.mxu0 %v638
  %640 = vmatprep.subr.mxu0 0.0
  %641 = vmatpush2.msra.mxu0 0.0
  %642 = vmatprep.subr.mxu0 0.0
  %643 = vmatpush2.msra.mxu0 0.0
  %644 = vmatprep.subr.mxu0 0.0
  %645 = vmatpush2.msra.mxu0 0.0
  %646 = vmatprep.subr.mxu0 0.0
  %647 = vmatpush2.msra.mxu0 0.0
  %648 = vmatprep.subr.mxu0 0.0
  %649 = vmatpush2.msra.mxu0 0.0
  %650 = vmatprep.subr.mxu0 0.0
  %651 = vmatpush2.msra.mxu0 0.0
  %652 = vmatprep.subr.mxu0 0.0
  %653 = vmatpush2.msra.mxu0 0.0
  %654 = vmatprep.subr.mxu0 0.0
  %655 = vmatpush2.msra.mxu0 0.0
  %656 = vmatprep.subr.mxu0 0.0
  %657 = vmatpush2.msra.mxu0 0.0
  %658 = vmatprep.subr.mxu0 0.0
  %659 = vmatpush2.msra.mxu0 0.0
  %660 = vmatprep.subr.mxu0 0.0
  %661 = vmatpush2.msra.mxu0 0.0
  %662 = vmatprep.subr.mxu0 0.0
  %663 = vmatpush2.msra.mxu0 0.0
  %664 = vmatprep.subr.mxu0 0.0
  %665 = vmatpush2.msra.mxu0 0.0
  %666 = vmatprep.subr.mxu0 0.0
  %667 = vmatpush2.msra.mxu0 0.0
  %668 = vmatprep.subr.mxu0 0.0
  %669 = vmatpush2.msra.mxu0 0.0
  %670 = vmatprep.subr.mxu0 0.0
  %671 = vmatpush2.msra.mxu0 0.0
  %672 = vmatprep.mubr.f32.mxu0 0.0
  %v673 = vand.u32 %v480, 4294901760
  %674 = vmatmul.mubr.f32.gmra.mxu0 %v673
  %v675 = vpop.f32.mrf.mxu0
  %v676 = vadd.f32 %v565, %v675
  %v677 = vpop.f32.mrf.mxu0
  %678 = vmatprep.mubr.f32.mxu0 0.0
  %v679 = vand.u32 %v483, 4294901760
  %680 = vmatmul.mubr.f32.gmra.mxu0 %v679
  %v681 = vpop.f32.mrf.mxu0
  %v682 = vadd.f32 %v575, %v681
  %v683 = vpop.f32.mrf.mxu0
  %684 = vmatprep.mubr.f32.mxu0 0.0
  %v685 = vand.u32 %v486, 4294901760
  %686 = vmatmul.mubr.f32.gmra.mxu0 %v685
  %v687 = vpop.f32.mrf.mxu0
  %v688 = vadd.f32 %v585, %v687
  %v689 = vpop.f32.mrf.mxu0
  %690 = vmatprep.mubr.f32.mxu0 0.0
  %v691 = vand.u32 %v489, 4294901760
  %692 = vmatmul.mubr.f32.gmra.mxu0 %v691
  %v693 = vpop.f32.mrf.mxu0
  %v694 = vadd.f32 %v595, %v693
  %v695 = vpop.f32.mrf.mxu0
  %696 = vdwg.mxu0
  %697 = vmatprep.subr.mxu0 0.0
  %698 = vmatpush1.msra.mxu0 0.0
  %699 = vmatprep.subr.mxu0 0.0
  %700 = vmatpush1.msra.mxu0 0.0
  %701 = vmatprep.subr.mxu0 0.0
  %702 = vmatpush1.msra.mxu0 0.0
  %703 = vmatprep.subr.mxu0 0.0
  %704 = vmatpush1.msra.mxu0 0.0
  %705 = vmatprep.subr.mxu0 0.0
  %706 = vmatpush1.msra.mxu0 0.0
  %707 = vmatprep.subr.mxu0 0.0
  %708 = vmatpush1.msra.mxu0 0.0
  %709 = vmatprep.subr.mxu0 0.0
  %710 = vmatpush1.msra.mxu0 0.0
  %711 = vmatprep.subr.mxu0 0.0
  %712 = vmatpush1.msra.mxu0 0.0
  %713 = vmatprep.subr.mxu0 0.0
  %714 = vmatpush1.msra.mxu0 0.0
  %715 = vmatprep.subr.mxu0 0.0
  %716 = vmatpush1.msra.mxu0 0.0
  %717 = vmatprep.subr.mxu0 0.0
  %718 = vmatpush1.msra.mxu0 0.0
  %719 = vmatprep.subr.mxu0 0.0
  %720 = vmatpush1.msra.mxu0 0.0
  %721 = vmatprep.subr.mxu0 0.0
  %722 = vmatpush1.msra.mxu0 0.0
  %723 = vmatprep.subr.mxu0 0.0
  %724 = vmatpush1.msra.mxu0 0.0
  %725 = vmatprep.subr.mxu0 0.0
  %v726 = vand.u32 %v477, 4294901760
  %v727 = vsub.f32 %v477, %v726
  %728 = vmatpush1.msra.mxu0 %v727
  %729 = vmatprep.subr.mxu0 0.0
  %v730 = vand.u32 %v374, 4294901760
  %v731 = vsub.f32 %v374, %v730
  %732 = vmatpush1.msra.mxu0 %v731
  %733 = vmatprep.subr.mxu0 0.0
  %734 = vmatpush2.msra.mxu0 0.0
  %735 = vmatprep.subr.mxu0 0.0
  %736 = vmatpush2.msra.mxu0 0.0
  %737 = vmatprep.subr.mxu0 0.0
  %738 = vmatpush2.msra.mxu0 0.0
  %739 = vmatprep.subr.mxu0 0.0
  %740 = vmatpush2.msra.mxu0 0.0
  %741 = vmatprep.subr.mxu0 0.0
  %742 = vmatpush2.msra.mxu0 0.0
  %743 = vmatprep.subr.mxu0 0.0
  %744 = vmatpush2.msra.mxu0 0.0
  %745 = vmatprep.subr.mxu0 0.0
  %746 = vmatpush2.msra.mxu0 0.0
  %747 = vmatprep.subr.mxu0 0.0
  %748 = vmatpush2.msra.mxu0 0.0
  %749 = vmatprep.subr.mxu0 0.0
  %750 = vmatpush2.msra.mxu0 0.0
  %751 = vmatprep.subr.mxu0 0.0
  %752 = vmatpush2.msra.mxu0 0.0
  %753 = vmatprep.subr.mxu0 0.0
  %754 = vmatpush2.msra.mxu0 0.0
  %755 = vmatprep.subr.mxu0 0.0
  %756 = vmatpush2.msra.mxu0 0.0
  %757 = vmatprep.subr.mxu0 0.0
  %758 = vmatpush2.msra.mxu0 0.0
  %759 = vmatprep.subr.mxu0 0.0
  %760 = vmatpush2.msra.mxu0 0.0
  %761 = vmatprep.subr.mxu0 0.0
  %762 = vmatpush2.msra.mxu0 0.0
  %763 = vmatprep.subr.mxu0 0.0
  %764 = vmatpush2.msra.mxu0 0.0
  %765 = vmatprep.mubr.f32.mxu0 0.0
  %v766 = vand.u32 %v480, 4294901760
  %v767 = vsub.f32 %v480, %v766
  %768 = vmatmul.mubr.f32.gmra.mxu0 %v767
  %v769 = vpop.f32.mrf.mxu0
  %v770 = vadd.f32 %v676, %v769
  %v771 = vpop.f32.mrf.mxu0
  %772 = vmatprep.mubr.f32.mxu0 0.0
  %v773 = vand.u32 %v483, 4294901760
  %v774 = vsub.f32 %v483, %v773
  %775 = vmatmul.mubr.f32.gmra.mxu0 %v774
  %v776 = vpop.f32.mrf.mxu0
  %v777 = vadd.f32 %v682, %v776
  %v778 = vpop.f32.mrf.mxu0
  %779 = vmatprep.mubr.f32.mxu0 0.0
  %v780 = vand.u32 %v486, 4294901760
  %v781 = vsub.f32 %v486, %v780
  %782 = vmatmul.mubr.f32.gmra.mxu0 %v781
  %v783 = vpop.f32.mrf.mxu0
  %v784 = vadd.f32 %v688, %v783
  %v785 = vpop.f32.mrf.mxu0
  %786 = vmatprep.mubr.f32.mxu0 0.0
  %v787 = vand.u32 %v489, 4294901760
  %v788 = vsub.f32 %v489, %v787
  %789 = vmatmul.mubr.f32.gmra.mxu0 %v788
  %v790 = vpop.f32.mrf.mxu0
  %v791 = vadd.f32 %v694, %v790
  %v792 = vpop.f32.mrf.mxu0
  %793 = vdwg.mxu0
  %794 = vmatprep.subr.mxu0 0.0
  %795 = vmatpush1.msra.mxu0 0.0
  %796 = vmatprep.subr.mxu0 0.0
  %797 = vmatpush1.msra.mxu0 0.0
  %798 = vmatprep.subr.mxu0 0.0
  %799 = vmatpush1.msra.mxu0 0.0
  %800 = vmatprep.subr.mxu0 0.0
  %801 = vmatpush1.msra.mxu0 0.0
  %802 = vmatprep.subr.mxu0 0.0
  %803 = vmatpush1.msra.mxu0 0.0
  %804 = vmatprep.subr.mxu0 0.0
  %805 = vmatpush1.msra.mxu0 0.0
  %806 = vmatprep.subr.mxu0 0.0
  %807 = vmatpush1.msra.mxu0 0.0
  %808 = vmatprep.subr.mxu0 0.0
  %809 = vmatpush1.msra.mxu0 0.0
  %810 = vmatprep.subr.mxu0 0.0
  %811 = vmatpush1.msra.mxu0 0.0
  %812 = vmatprep.subr.mxu0 0.0
  %813 = vmatpush1.msra.mxu0 0.0
  %814 = vmatprep.subr.mxu0 0.0
  %815 = vmatpush1.msra.mxu0 0.0
  %816 = vmatprep.subr.mxu0 0.0
  %817 = vmatpush1.msra.mxu0 0.0
  %818 = vmatprep.subr.mxu0 0.0
  %819 = vmatpush1.msra.mxu0 0.0
  %820 = vmatprep.subr.mxu0 0.0
  %821 = vmatpush1.msra.mxu0 0.0
  %822 = vmatprep.subr.mxu0 0.0
  %v823 = vand.u32 %v477, 4294901760
  %824 = vmatpush1.msra.mxu0 %v823
  %825 = vmatprep.subr.mxu0 0.0
  %v826 = vand.u32 %v374, 4294901760
  %827 = vmatpush1.msra.mxu0 %v826
  %828 = vmatprep.subr.mxu0 0.0
  %829 = vmatpush2.msra.mxu0 0.0
  %830 = vmatprep.subr.mxu0 0.0
  %831 = vmatpush2.msra.mxu0 0.0
  %832 = vmatprep.subr.mxu0 0.0
  %833 = vmatpush2.msra.mxu0 0.0
  %834 = vmatprep.subr.mxu0 0.0
  %835 = vmatpush2.msra.mxu0 0.0
  %836 = vmatprep.subr.mxu0 0.0
  %837 = vmatpush2.msra.mxu0 0.0
  %838 = vmatprep.subr.mxu0 0.0
  %839 = vmatpush2.msra.mxu0 0.0
  %840 = vmatprep.subr.mxu0 0.0
  %841 = vmatpush2.msra.mxu0 0.0
  %842 = vmatprep.subr.mxu0 0.0
  %843 = vmatpush2.msra.mxu0 0.0
  %844 = vmatprep.subr.mxu0 0.0
  %845 = vmatpush2.msra.mxu0 0.0
  %846 = vmatprep.subr.mxu0 0.0
  %847 = vmatpush2.msra.mxu0 0.0
  %848 = vmatprep.subr.mxu0 0.0
  %849 = vmatpush2.msra.mxu0 0.0
  %850 = vmatprep.subr.mxu0 0.0
  %851 = vmatpush2.msra.mxu0 0.0
  %852 = vmatprep.subr.mxu0 0.0
  %853 = vmatpush2.msra.mxu0 0.0
  %854 = vmatprep.subr.mxu0 0.0
  %855 = vmatpush2.msra.mxu0 0.0
  %856 = vmatprep.subr.mxu0 0.0
  %857 = vmatpush2.msra.mxu0 0.0
  %858 = vmatprep.subr.mxu0 0.0
  %859 = vmatpush2.msra.mxu0 0.0
  %860 = vmatprep.mubr.f32.mxu0 0.0
  %v861 = vand.u32 %v480, 4294901760
  %v862 = vsub.f32 %v480, %v861
  %v863 = vand.u32 %v862, 4294901760
  %864 = vmatmul.mubr.f32.gmra.mxu0 %v863
  %v865 = vpop.f32.mrf.mxu0
  %v866 = vadd.f32 %v770, %v865
  %v867 = vpop.f32.mrf.mxu0
  %868 = vmatprep.mubr.f32.mxu0 0.0
  %v869 = vand.u32 %v483, 4294901760
  %v870 = vsub.f32 %v483, %v869
  %v871 = vand.u32 %v870, 4294901760
  %872 = vmatmul.mubr.f32.gmra.mxu0 %v871
  %v873 = vpop.f32.mrf.mxu0
  %v874 = vadd.f32 %v777, %v873
  %v875 = vpop.f32.mrf.mxu0
  %876 = vmatprep.mubr.f32.mxu0 0.0
  %v877 = vand.u32 %v486, 4294901760
  %v878 = vsub.f32 %v486, %v877
  %v879 = vand.u32 %v878, 4294901760
  %880 = vmatmul.mubr.f32.gmra.mxu0 %v879
  %v881 = vpop.f32.mrf.mxu0
  %v882 = vadd.f32 %v784, %v881
  %v883 = vpop.f32.mrf.mxu0
  %884 = vmatprep.mubr.f32.mxu0 0.0
  %v885 = vand.u32 %v489, 4294901760
  %v886 = vsub.f32 %v489, %v885
  %v887 = vand.u32 %v886, 4294901760
  %888 = vmatmul.mubr.f32.gmra.mxu0 %v887
  %v889 = vpop.f32.mrf.mxu0
  %v890 = vadd.f32 %v791, %v889
  %v891 = vpop.f32.mrf.mxu0
  %892 = vdwg.mxu0
  %893 = vmatprep.subr.mxu0 0.0
  %894 = vmatpush1.msra.mxu0 0.0
  %895 = vmatprep.subr.mxu0 0.0
  %896 = vmatpush1.msra.mxu0 0.0
  %897 = vmatprep.subr.mxu0 0.0
  %898 = vmatpush1.msra.mxu0 0.0
  %899 = vmatprep.subr.mxu0 0.0
  %900 = vmatpush1.msra.mxu0 0.0
  %901 = vmatprep.subr.mxu0 0.0
  %902 = vmatpush1.msra.mxu0 0.0
  %903 = vmatprep.subr.mxu0 0.0
  %904 = vmatpush1.msra.mxu0 0.0
  %905 = vmatprep.subr.mxu0 0.0
  %906 = vmatpush1.msra.mxu0 0.0
  %907 = vmatprep.subr.mxu0 0.0
  %908 = vmatpush1.msra.mxu0 0.0
  %909 = vmatprep.subr.mxu0 0.0
  %910 = vmatpush1.msra.mxu0 0.0
  %911 = vmatprep.subr.mxu0 0.0
  %912 = vmatpush1.msra.mxu0 0.0
  %913 = vmatprep.subr.mxu0 0.0
  %914 = vmatpush1.msra.mxu0 0.0
  %915 = vmatprep.subr.mxu0 0.0
  %916 = vmatpush1.msra.mxu0 0.0
  %917 = vmatprep.subr.mxu0 0.0
  %918 = vmatpush1.msra.mxu0 0.0
  %919 = vmatprep.subr.mxu0 0.0
  %920 = vmatpush1.msra.mxu0 0.0
  %921 = vmatprep.subr.mxu0 0.0
  %v922 = vand.u32 %v477, 4294901760
  %v923 = vsub.f32 %v477, %v922
  %v924 = vand.u32 %v923, 4294901760
  %925 = vmatpush1.msra.mxu0 %v924
  %926 = vmatprep.subr.mxu0 0.0
  %v927 = vand.u32 %v374, 4294901760
  %v928 = vsub.f32 %v374, %v927
  %v929 = vand.u32 %v928, 4294901760
  %930 = vmatpush1.msra.mxu0 %v929
  %931 = vmatprep.subr.mxu0 0.0
  %932 = vmatpush2.msra.mxu0 0.0
  %933 = vmatprep.subr.mxu0 0.0
  %934 = vmatpush2.msra.mxu0 0.0
  %935 = vmatprep.subr.mxu0 0.0
  %936 = vmatpush2.msra.mxu0 0.0
  %937 = vmatprep.subr.mxu0 0.0
  %938 = vmatpush2.msra.mxu0 0.0
  %939 = vmatprep.subr.mxu0 0.0
  %940 = vmatpush2.msra.mxu0 0.0
  %941 = vmatprep.subr.mxu0 0.0
  %942 = vmatpush2.msra.mxu0 0.0
  %943 = vmatprep.subr.mxu0 0.0
  %944 = vmatpush2.msra.mxu0 0.0
  %945 = vmatprep.subr.mxu0 0.0
  %946 = vmatpush2.msra.mxu0 0.0
  %947 = vmatprep.subr.mxu0 0.0
  %948 = vmatpush2.msra.mxu0 0.0
  %949 = vmatprep.subr.mxu0 0.0
  %950 = vmatpush2.msra.mxu0 0.0
  %951 = vmatprep.subr.mxu0 0.0
  %952 = vmatpush2.msra.mxu0 0.0
  %953 = vmatprep.subr.mxu0 0.0
  %954 = vmatpush2.msra.mxu0 0.0
  %955 = vmatprep.subr.mxu0 0.0
  %956 = vmatpush2.msra.mxu0 0.0
  %957 = vmatprep.subr.mxu0 0.0
  %958 = vmatpush2.msra.mxu0 0.0
  %959 = vmatprep.subr.mxu0 0.0
  %960 = vmatpush2.msra.mxu0 0.0
  %961 = vmatprep.subr.mxu0 0.0
  %962 = vmatpush2.msra.mxu0 0.0
  %963 = vmatprep.mubr.f32.mxu0 0.0
  %v964 = vand.u32 %v480, 4294901760
  %965 = vmatmul.mubr.f32.gmra.mxu0 %v964
  %v966 = vpop.f32.mrf.mxu0
  %v967 = vadd.f32 %v866, %v966
  %v968 = vpop.f32.mrf.mxu0
  %969 = vmatprep.mubr.f32.mxu0 0.0
  %v970 = vand.u32 %v483, 4294901760
  %971 = vmatmul.mubr.f32.gmra.mxu0 %v970
  %v972 = vpop.f32.mrf.mxu0
  %v973 = vadd.f32 %v874, %v972
  %v974 = vpop.f32.mrf.mxu0
  %975 = vmatprep.mubr.f32.mxu0 0.0
  %v976 = vand.u32 %v486, 4294901760
  %977 = vmatmul.mubr.f32.gmra.mxu0 %v976
  %v978 = vpop.f32.mrf.mxu0
  %v979 = vadd.f32 %v882, %v978
  %v980 = vpop.f32.mrf.mxu0
  %981 = vmatprep.mubr.f32.mxu0 0.0
  %v982 = vand.u32 %v489, 4294901760
  %983 = vmatmul.mubr.f32.gmra.mxu0 %v982
  %v984 = vpop.f32.mrf.mxu0
  %v985 = vadd.f32 %v890, %v984
  %v986 = vpop.f32.mrf.mxu0
  %987 = vdwg.mxu0
  %988 = vmatprep.subr.mxu0 0.0
  %989 = vmatpush1.msra.mxu0 0.0
  %990 = vmatprep.subr.mxu0 0.0
  %991 = vmatpush1.msra.mxu0 0.0
  %992 = vmatprep.subr.mxu0 0.0
  %993 = vmatpush1.msra.mxu0 0.0
  %994 = vmatprep.subr.mxu0 0.0
  %995 = vmatpush1.msra.mxu0 0.0
  %996 = vmatprep.subr.mxu0 0.0
  %997 = vmatpush1.msra.mxu0 0.0
  %998 = vmatprep.subr.mxu0 0.0
  %999 = vmatpush1.msra.mxu0 0.0
  %1000 = vmatprep.subr.mxu0 0.0
  %1001 = vmatpush1.msra.mxu0 0.0
  %1002 = vmatprep.subr.mxu0 0.0
  %1003 = vmatpush1.msra.mxu0 0.0
  %1004 = vmatprep.subr.mxu0 0.0
  %1005 = vmatpush1.msra.mxu0 0.0
  %1006 = vmatprep.subr.mxu0 0.0
  %1007 = vmatpush1.msra.mxu0 0.0
  %1008 = vmatprep.subr.mxu0 0.0
  %1009 = vmatpush1.msra.mxu0 0.0
  %1010 = vmatprep.subr.mxu0 0.0
  %1011 = vmatpush1.msra.mxu0 0.0
  %1012 = vmatprep.subr.mxu0 0.0
  %1013 = vmatpush1.msra.mxu0 0.0
  %1014 = vmatprep.subr.mxu0 0.0
  %1015 = vmatpush1.msra.mxu0 0.0
  %1016 = vmatprep.subr.mxu0 0.0
  %v1017 = vand.u32 %v477, 4294901760
  %1018 = vmatpush1.msra.mxu0 %v1017
  %1019 = vmatprep.subr.mxu0 0.0
  %v1020 = vand.u32 %v374, 4294901760
  %1021 = vmatpush1.msra.mxu0 %v1020
  %1022 = vmatprep.subr.mxu0 0.0
  %1023 = vmatpush2.msra.mxu0 0.0
  %1024 = vmatprep.subr.mxu0 0.0
  %1025 = vmatpush2.msra.mxu0 0.0
  %1026 = vmatprep.subr.mxu0 0.0
  %1027 = vmatpush2.msra.mxu0 0.0
  %1028 = vmatprep.subr.mxu0 0.0
  %1029 = vmatpush2.msra.mxu0 0.0
  %1030 = vmatprep.subr.mxu0 0.0
  %1031 = vmatpush2.msra.mxu0 0.0
  %1032 = vmatprep.subr.mxu0 0.0
  %1033 = vmatpush2.msra.mxu0 0.0
  %1034 = vmatprep.subr.mxu0 0.0
  %1035 = vmatpush2.msra.mxu0 0.0
  %1036 = vmatprep.subr.mxu0 0.0
  %1037 = vmatpush2.msra.mxu0 0.0
  %1038 = vmatprep.subr.mxu0 0.0
  %1039 = vmatpush2.msra.mxu0 0.0
  %1040 = vmatprep.subr.mxu0 0.0
  %1041 = vmatpush2.msra.mxu0 0.0
  %1042 = vmatprep.subr.mxu0 0.0
  %1043 = vmatpush2.msra.mxu0 0.0
  %1044 = vmatprep.subr.mxu0 0.0
  %1045 = vmatpush2.msra.mxu0 0.0
  %1046 = vmatprep.subr.mxu0 0.0
  %1047 = vmatpush2.msra.mxu0 0.0
  %1048 = vmatprep.subr.mxu0 0.0
  %1049 = vmatpush2.msra.mxu0 0.0
  %1050 = vmatprep.subr.mxu0 0.0
  %1051 = vmatpush2.msra.mxu0 0.0
  %1052 = vmatprep.subr.mxu0 0.0
  %1053 = vmatpush2.msra.mxu0 0.0
  %1054 = vmatprep.mubr.f32.mxu0 0.0
  %v1055 = vand.u32 %v480, 4294901760
  %1056 = vmatmul.mubr.f32.gmra.mxu0 %v1055
  %v1057 = vpop.f32.mrf.mxu0
  %v1058 = vadd.f32 %v967, %v1057
  %v1059 = vpop.f32.mrf.mxu0
  %1060 = vmatprep.mubr.f32.mxu0 0.0
  %v1061 = vand.u32 %v483, 4294901760
  %1062 = vmatmul.mubr.f32.gmra.mxu0 %v1061
  %v1063 = vpop.f32.mrf.mxu0
  %v1064 = vadd.f32 %v973, %v1063
  %v1065 = vpop.f32.mrf.mxu0
  %1066 = vmatprep.mubr.f32.mxu0 0.0
  %v1067 = vand.u32 %v486, 4294901760
  %1068 = vmatmul.mubr.f32.gmra.mxu0 %v1067
  %v1069 = vpop.f32.mrf.mxu0
  %v1070 = vadd.f32 %v979, %v1069
  %v1071 = vpop.f32.mrf.mxu0
  %1072 = vmatprep.mubr.f32.mxu0 0.0
  %v1073 = vand.u32 %v489, 4294901760
  %1074 = vmatmul.mubr.f32.gmra.mxu0 %v1073
  %v1075 = vpop.f32.mrf.mxu0
  %v1076 = vadd.f32 %v985, %v1075
  %v1077 = vpop.f32.mrf.mxu0
  %1078 = vdwg.mxu0
  %v1080 = vsel %vm478, %v28, 0
  %v1083 = vsel %vm478, %v29, 0
  %v1086 = vsel %vm478, %v30, 0
  %v1089 = vsel %vm478, %v31, 0
  %1091 = vmatprep.subr.mxu0 0.0
  %1092 = vmatpush1.msra.mxu0 0.0
  %1093 = vmatprep.subr.mxu0 0.0
  %1094 = vmatpush1.msra.mxu0 0.0
  %1095 = vmatprep.subr.mxu0 0.0
  %1096 = vmatpush1.msra.mxu0 0.0
  %1097 = vmatprep.subr.mxu0 0.0
  %1098 = vmatpush1.msra.mxu0 0.0
  %1099 = vmatprep.subr.mxu0 0.0
  %1100 = vmatpush1.msra.mxu0 0.0
  %1101 = vmatprep.subr.mxu0 0.0
  %1102 = vmatpush1.msra.mxu0 0.0
  %1103 = vmatprep.subr.mxu0 0.0
  %1104 = vmatpush1.msra.mxu0 0.0
  %1105 = vmatprep.subr.mxu0 0.0
  %1106 = vmatpush1.msra.mxu0 0.0
  %1107 = vmatprep.subr.mxu0 0.0
  %1108 = vmatpush1.msra.mxu0 0.0
  %1109 = vmatprep.subr.mxu0 0.0
  %1110 = vmatpush1.msra.mxu0 0.0
  %1111 = vmatprep.subr.mxu0 0.0
  %1112 = vmatpush1.msra.mxu0 0.0
  %1113 = vmatprep.subr.mxu0 0.0
  %1114 = vmatpush1.msra.mxu0 0.0
  %1115 = vmatprep.subr.mxu0 0.0
  %1116 = vmatpush1.msra.mxu0 0.0
  %1117 = vmatprep.subr.mxu0 0.0
  %1118 = vmatpush1.msra.mxu0 0.0
  %1119 = vmatprep.subr.mxu0 0.0
  %v1120 = vand.u32 %v271, 4294901760
  %1121 = vmatpush1.msra.mxu0 %v1120
  %1122 = vmatprep.subr.mxu0 0.0
  %v1123 = vand.u32 %v167, 4294901760
  %1124 = vmatpush1.msra.mxu0 %v1123
  %1125 = vmatprep.subr.mxu0 0.0
  %1126 = vmatpush2.msra.mxu0 0.0
  %1127 = vmatprep.subr.mxu0 0.0
  %1128 = vmatpush2.msra.mxu0 0.0
  %1129 = vmatprep.subr.mxu0 0.0
  %1130 = vmatpush2.msra.mxu0 0.0
  %1131 = vmatprep.subr.mxu0 0.0
  %1132 = vmatpush2.msra.mxu0 0.0
  %1133 = vmatprep.subr.mxu0 0.0
  %1134 = vmatpush2.msra.mxu0 0.0
  %1135 = vmatprep.subr.mxu0 0.0
  %1136 = vmatpush2.msra.mxu0 0.0
  %1137 = vmatprep.subr.mxu0 0.0
  %1138 = vmatpush2.msra.mxu0 0.0
  %1139 = vmatprep.subr.mxu0 0.0
  %1140 = vmatpush2.msra.mxu0 0.0
  %1141 = vmatprep.subr.mxu0 0.0
  %1142 = vmatpush2.msra.mxu0 0.0
  %1143 = vmatprep.subr.mxu0 0.0
  %1144 = vmatpush2.msra.mxu0 0.0
  %1145 = vmatprep.subr.mxu0 0.0
  %1146 = vmatpush2.msra.mxu0 0.0
  %1147 = vmatprep.subr.mxu0 0.0
  %1148 = vmatpush2.msra.mxu0 0.0
  %1149 = vmatprep.subr.mxu0 0.0
  %1150 = vmatpush2.msra.mxu0 0.0
  %1151 = vmatprep.subr.mxu0 0.0
  %1152 = vmatpush2.msra.mxu0 0.0
  %1153 = vmatprep.subr.mxu0 0.0
  %1154 = vmatpush2.msra.mxu0 0.0
  %1155 = vmatprep.subr.mxu0 0.0
  %1156 = vmatpush2.msra.mxu0 0.0
  %1157 = vmatprep.mubr.f32.mxu0 0.0
  %v1158 = vand.u32 %v1080, 4294901760
  %v1159 = vsub.f32 %v1080, %v1158
  %v1160 = vand.u32 %v1159, 4294901760
  %v1161 = vsub.f32 %v1159, %v1160
  %v1162 = vand.u32 %v1161, 4294901760
  %1163 = vmatmul.mubr.f32.gmra.mxu0 %v1162
  %v1164 = vpop.f32.mrf.mxu0
  %v1165 = vadd.f32 %v1058, %v1164
  %v1166 = vpop.f32.mrf.mxu0
  %1167 = vmatprep.mubr.f32.mxu0 0.0
  %v1168 = vand.u32 %v1083, 4294901760
  %v1169 = vsub.f32 %v1083, %v1168
  %v1170 = vand.u32 %v1169, 4294901760
  %v1171 = vsub.f32 %v1169, %v1170
  %v1172 = vand.u32 %v1171, 4294901760
  %1173 = vmatmul.mubr.f32.gmra.mxu0 %v1172
  %v1174 = vpop.f32.mrf.mxu0
  %v1175 = vadd.f32 %v1064, %v1174
  %v1176 = vpop.f32.mrf.mxu0
  %1177 = vmatprep.mubr.f32.mxu0 0.0
  %v1178 = vand.u32 %v1086, 4294901760
  %v1179 = vsub.f32 %v1086, %v1178
  %v1180 = vand.u32 %v1179, 4294901760
  %v1181 = vsub.f32 %v1179, %v1180
  %v1182 = vand.u32 %v1181, 4294901760
  %1183 = vmatmul.mubr.f32.gmra.mxu0 %v1182
  %v1184 = vpop.f32.mrf.mxu0
  %v1185 = vadd.f32 %v1070, %v1184
  %v1186 = vpop.f32.mrf.mxu0
  %1187 = vmatprep.mubr.f32.mxu0 0.0
  %v1188 = vand.u32 %v1089, 4294901760
  %v1189 = vsub.f32 %v1089, %v1188
  %v1190 = vand.u32 %v1189, 4294901760
  %v1191 = vsub.f32 %v1189, %v1190
  %v1192 = vand.u32 %v1191, 4294901760
  %1193 = vmatmul.mubr.f32.gmra.mxu0 %v1192
  %v1194 = vpop.f32.mrf.mxu0
  %v1195 = vadd.f32 %v1076, %v1194
  %v1196 = vpop.f32.mrf.mxu0
  %1197 = vdwg.mxu0
  %1198 = vmatprep.subr.mxu0 0.0
  %1199 = vmatpush1.msra.mxu0 0.0
  %1200 = vmatprep.subr.mxu0 0.0
  %1201 = vmatpush1.msra.mxu0 0.0
  %1202 = vmatprep.subr.mxu0 0.0
  %1203 = vmatpush1.msra.mxu0 0.0
  %1204 = vmatprep.subr.mxu0 0.0
  %1205 = vmatpush1.msra.mxu0 0.0
  %1206 = vmatprep.subr.mxu0 0.0
  %1207 = vmatpush1.msra.mxu0 0.0
  %1208 = vmatprep.subr.mxu0 0.0
  %1209 = vmatpush1.msra.mxu0 0.0
  %1210 = vmatprep.subr.mxu0 0.0
  %1211 = vmatpush1.msra.mxu0 0.0
  %1212 = vmatprep.subr.mxu0 0.0
  %1213 = vmatpush1.msra.mxu0 0.0
  %1214 = vmatprep.subr.mxu0 0.0
  %1215 = vmatpush1.msra.mxu0 0.0
  %1216 = vmatprep.subr.mxu0 0.0
  %1217 = vmatpush1.msra.mxu0 0.0
  %1218 = vmatprep.subr.mxu0 0.0
  %1219 = vmatpush1.msra.mxu0 0.0
  %1220 = vmatprep.subr.mxu0 0.0
  %1221 = vmatpush1.msra.mxu0 0.0
  %1222 = vmatprep.subr.mxu0 0.0
  %1223 = vmatpush1.msra.mxu0 0.0
  %1224 = vmatprep.subr.mxu0 0.0
  %1225 = vmatpush1.msra.mxu0 0.0
  %1226 = vmatprep.subr.mxu0 0.0
  %v1227 = vand.u32 %v271, 4294901760
  %v1228 = vsub.f32 %v271, %v1227
  %v1229 = vand.u32 %v1228, 4294901760
  %v1230 = vsub.f32 %v1228, %v1229
  %v1231 = vand.u32 %v1230, 4294901760
  %1232 = vmatpush1.msra.mxu0 %v1231
  %1233 = vmatprep.subr.mxu0 0.0
  %v1234 = vand.u32 %v167, 4294901760
  %v1235 = vsub.f32 %v167, %v1234
  %v1236 = vand.u32 %v1235, 4294901760
  %v1237 = vsub.f32 %v1235, %v1236
  %v1238 = vand.u32 %v1237, 4294901760
  %1239 = vmatpush1.msra.mxu0 %v1238
  %1240 = vmatprep.subr.mxu0 0.0
  %1241 = vmatpush2.msra.mxu0 0.0
  %1242 = vmatprep.subr.mxu0 0.0
  %1243 = vmatpush2.msra.mxu0 0.0
  %1244 = vmatprep.subr.mxu0 0.0
  %1245 = vmatpush2.msra.mxu0 0.0
  %1246 = vmatprep.subr.mxu0 0.0
  %1247 = vmatpush2.msra.mxu0 0.0
  %1248 = vmatprep.subr.mxu0 0.0
  %1249 = vmatpush2.msra.mxu0 0.0
  %1250 = vmatprep.subr.mxu0 0.0
  %1251 = vmatpush2.msra.mxu0 0.0
  %1252 = vmatprep.subr.mxu0 0.0
  %1253 = vmatpush2.msra.mxu0 0.0
  %1254 = vmatprep.subr.mxu0 0.0
  %1255 = vmatpush2.msra.mxu0 0.0
  %1256 = vmatprep.subr.mxu0 0.0
  %1257 = vmatpush2.msra.mxu0 0.0
  %1258 = vmatprep.subr.mxu0 0.0
  %1259 = vmatpush2.msra.mxu0 0.0
  %1260 = vmatprep.subr.mxu0 0.0
  %1261 = vmatpush2.msra.mxu0 0.0
  %1262 = vmatprep.subr.mxu0 0.0
  %1263 = vmatpush2.msra.mxu0 0.0
  %1264 = vmatprep.subr.mxu0 0.0
  %1265 = vmatpush2.msra.mxu0 0.0
  %1266 = vmatprep.subr.mxu0 0.0
  %1267 = vmatpush2.msra.mxu0 0.0
  %1268 = vmatprep.subr.mxu0 0.0
  %1269 = vmatpush2.msra.mxu0 0.0
  %1270 = vmatprep.subr.mxu0 0.0
  %1271 = vmatpush2.msra.mxu0 0.0
  %1272 = vmatprep.mubr.f32.mxu0 0.0
  %v1273 = vand.u32 %v1080, 4294901760
  %1274 = vmatmul.mubr.f32.gmra.mxu0 %v1273
  %v1275 = vpop.f32.mrf.mxu0
  %v1276 = vadd.f32 %v1165, %v1275
  %v1277 = vpop.f32.mrf.mxu0
  %1278 = vmatprep.mubr.f32.mxu0 0.0
  %v1279 = vand.u32 %v1083, 4294901760
  %1280 = vmatmul.mubr.f32.gmra.mxu0 %v1279
  %v1281 = vpop.f32.mrf.mxu0
  %v1282 = vadd.f32 %v1175, %v1281
  %v1283 = vpop.f32.mrf.mxu0
  %1284 = vmatprep.mubr.f32.mxu0 0.0
  %v1285 = vand.u32 %v1086, 4294901760
  %1286 = vmatmul.mubr.f32.gmra.mxu0 %v1285
  %v1287 = vpop.f32.mrf.mxu0
  %v1288 = vadd.f32 %v1185, %v1287
  %v1289 = vpop.f32.mrf.mxu0
  %1290 = vmatprep.mubr.f32.mxu0 0.0
  %v1291 = vand.u32 %v1089, 4294901760
  %1292 = vmatmul.mubr.f32.gmra.mxu0 %v1291
  %v1293 = vpop.f32.mrf.mxu0
  %v1294 = vadd.f32 %v1195, %v1293
  %v1295 = vpop.f32.mrf.mxu0
  %1296 = vdwg.mxu0
  %1297 = vmatprep.subr.mxu0 0.0
  %1298 = vmatpush1.msra.mxu0 0.0
  %1299 = vmatprep.subr.mxu0 0.0
  %1300 = vmatpush1.msra.mxu0 0.0
  %1301 = vmatprep.subr.mxu0 0.0
  %1302 = vmatpush1.msra.mxu0 0.0
  %1303 = vmatprep.subr.mxu0 0.0
  %1304 = vmatpush1.msra.mxu0 0.0
  %1305 = vmatprep.subr.mxu0 0.0
  %1306 = vmatpush1.msra.mxu0 0.0
  %1307 = vmatprep.subr.mxu0 0.0
  %1308 = vmatpush1.msra.mxu0 0.0
  %1309 = vmatprep.subr.mxu0 0.0
  %1310 = vmatpush1.msra.mxu0 0.0
  %1311 = vmatprep.subr.mxu0 0.0
  %1312 = vmatpush1.msra.mxu0 0.0
  %1313 = vmatprep.subr.mxu0 0.0
  %1314 = vmatpush1.msra.mxu0 0.0
  %1315 = vmatprep.subr.mxu0 0.0
  %1316 = vmatpush1.msra.mxu0 0.0
  %1317 = vmatprep.subr.mxu0 0.0
  %1318 = vmatpush1.msra.mxu0 0.0
  %1319 = vmatprep.subr.mxu0 0.0
  %1320 = vmatpush1.msra.mxu0 0.0
  %1321 = vmatprep.subr.mxu0 0.0
  %1322 = vmatpush1.msra.mxu0 0.0
  %1323 = vmatprep.subr.mxu0 0.0
  %1324 = vmatpush1.msra.mxu0 0.0
  %1325 = vmatprep.subr.mxu0 0.0
  %v1326 = vand.u32 %v271, 4294901760
  %v1327 = vsub.f32 %v271, %v1326
  %1328 = vmatpush1.msra.mxu0 %v1327
  %1329 = vmatprep.subr.mxu0 0.0
  %v1330 = vand.u32 %v167, 4294901760
  %v1331 = vsub.f32 %v167, %v1330
  %1332 = vmatpush1.msra.mxu0 %v1331
  %1333 = vmatprep.subr.mxu0 0.0
  %1334 = vmatpush2.msra.mxu0 0.0
  %1335 = vmatprep.subr.mxu0 0.0
  %1336 = vmatpush2.msra.mxu0 0.0
  %1337 = vmatprep.subr.mxu0 0.0
  %1338 = vmatpush2.msra.mxu0 0.0
  %1339 = vmatprep.subr.mxu0 0.0
  %1340 = vmatpush2.msra.mxu0 0.0
  %1341 = vmatprep.subr.mxu0 0.0
  %1342 = vmatpush2.msra.mxu0 0.0
  %1343 = vmatprep.subr.mxu0 0.0
  %1344 = vmatpush2.msra.mxu0 0.0
  %1345 = vmatprep.subr.mxu0 0.0
  %1346 = vmatpush2.msra.mxu0 0.0
  %1347 = vmatprep.subr.mxu0 0.0
  %1348 = vmatpush2.msra.mxu0 0.0
  %1349 = vmatprep.subr.mxu0 0.0
  %1350 = vmatpush2.msra.mxu0 0.0
  %1351 = vmatprep.subr.mxu0 0.0
  %1352 = vmatpush2.msra.mxu0 0.0
  %1353 = vmatprep.subr.mxu0 0.0
  %1354 = vmatpush2.msra.mxu0 0.0
  %1355 = vmatprep.subr.mxu0 0.0
  %1356 = vmatpush2.msra.mxu0 0.0
  %1357 = vmatprep.subr.mxu0 0.0
  %1358 = vmatpush2.msra.mxu0 0.0
  %1359 = vmatprep.subr.mxu0 0.0
  %1360 = vmatpush2.msra.mxu0 0.0
  %1361 = vmatprep.subr.mxu0 0.0
  %1362 = vmatpush2.msra.mxu0 0.0
  %1363 = vmatprep.subr.mxu0 0.0
  %1364 = vmatpush2.msra.mxu0 0.0
  %1365 = vmatprep.mubr.f32.mxu0 0.0
  %v1366 = vand.u32 %v1080, 4294901760
  %v1367 = vsub.f32 %v1080, %v1366
  %1368 = vmatmul.mubr.f32.gmra.mxu0 %v1367
  %v1369 = vpop.f32.mrf.mxu0
  %v1370 = vadd.f32 %v1276, %v1369
  %v1371 = vpop.f32.mrf.mxu0
  %1372 = vmatprep.mubr.f32.mxu0 0.0
  %v1373 = vand.u32 %v1083, 4294901760
  %v1374 = vsub.f32 %v1083, %v1373
  %1375 = vmatmul.mubr.f32.gmra.mxu0 %v1374
  %v1376 = vpop.f32.mrf.mxu0
  %v1377 = vadd.f32 %v1282, %v1376
  %v1378 = vpop.f32.mrf.mxu0
  %1379 = vmatprep.mubr.f32.mxu0 0.0
  %v1380 = vand.u32 %v1086, 4294901760
  %v1381 = vsub.f32 %v1086, %v1380
  %1382 = vmatmul.mubr.f32.gmra.mxu0 %v1381
  %v1383 = vpop.f32.mrf.mxu0
  %v1384 = vadd.f32 %v1288, %v1383
  %v1385 = vpop.f32.mrf.mxu0
  %1386 = vmatprep.mubr.f32.mxu0 0.0
  %v1387 = vand.u32 %v1089, 4294901760
  %v1388 = vsub.f32 %v1089, %v1387
  %1389 = vmatmul.mubr.f32.gmra.mxu0 %v1388
  %v1390 = vpop.f32.mrf.mxu0
  %v1391 = vadd.f32 %v1294, %v1390
  %v1392 = vpop.f32.mrf.mxu0
  %1393 = vdwg.mxu0
  %1394 = vmatprep.subr.mxu0 0.0
  %1395 = vmatpush1.msra.mxu0 0.0
  %1396 = vmatprep.subr.mxu0 0.0
  %1397 = vmatpush1.msra.mxu0 0.0
  %1398 = vmatprep.subr.mxu0 0.0
  %1399 = vmatpush1.msra.mxu0 0.0
  %1400 = vmatprep.subr.mxu0 0.0
  %1401 = vmatpush1.msra.mxu0 0.0
  %1402 = vmatprep.subr.mxu0 0.0
  %1403 = vmatpush1.msra.mxu0 0.0
  %1404 = vmatprep.subr.mxu0 0.0
  %1405 = vmatpush1.msra.mxu0 0.0
  %1406 = vmatprep.subr.mxu0 0.0
  %1407 = vmatpush1.msra.mxu0 0.0
  %1408 = vmatprep.subr.mxu0 0.0
  %1409 = vmatpush1.msra.mxu0 0.0
  %1410 = vmatprep.subr.mxu0 0.0
  %1411 = vmatpush1.msra.mxu0 0.0
  %1412 = vmatprep.subr.mxu0 0.0
  %1413 = vmatpush1.msra.mxu0 0.0
  %1414 = vmatprep.subr.mxu0 0.0
  %1415 = vmatpush1.msra.mxu0 0.0
  %1416 = vmatprep.subr.mxu0 0.0
  %1417 = vmatpush1.msra.mxu0 0.0
  %1418 = vmatprep.subr.mxu0 0.0
  %1419 = vmatpush1.msra.mxu0 0.0
  %1420 = vmatprep.subr.mxu0 0.0
  %1421 = vmatpush1.msra.mxu0 0.0
  %1422 = vmatprep.subr.mxu0 0.0
  %v1423 = vand.u32 %v271, 4294901760
  %1424 = vmatpush1.msra.mxu0 %v1423
  %1425 = vmatprep.subr.mxu0 0.0
  %v1426 = vand.u32 %v167, 4294901760
  %1427 = vmatpush1.msra.mxu0 %v1426
  %1428 = vmatprep.subr.mxu0 0.0
  %1429 = vmatpush2.msra.mxu0 0.0
  %1430 = vmatprep.subr.mxu0 0.0
  %1431 = vmatpush2.msra.mxu0 0.0
  %1432 = vmatprep.subr.mxu0 0.0
  %1433 = vmatpush2.msra.mxu0 0.0
  %1434 = vmatprep.subr.mxu0 0.0
  %1435 = vmatpush2.msra.mxu0 0.0
  %1436 = vmatprep.subr.mxu0 0.0
  %1437 = vmatpush2.msra.mxu0 0.0
  %1438 = vmatprep.subr.mxu0 0.0
  %1439 = vmatpush2.msra.mxu0 0.0
  %1440 = vmatprep.subr.mxu0 0.0
  %1441 = vmatpush2.msra.mxu0 0.0
  %1442 = vmatprep.subr.mxu0 0.0
  %1443 = vmatpush2.msra.mxu0 0.0
  %1444 = vmatprep.subr.mxu0 0.0
  %1445 = vmatpush2.msra.mxu0 0.0
  %1446 = vmatprep.subr.mxu0 0.0
  %1447 = vmatpush2.msra.mxu0 0.0
  %1448 = vmatprep.subr.mxu0 0.0
  %1449 = vmatpush2.msra.mxu0 0.0
  %1450 = vmatprep.subr.mxu0 0.0
  %1451 = vmatpush2.msra.mxu0 0.0
  %1452 = vmatprep.subr.mxu0 0.0
  %1453 = vmatpush2.msra.mxu0 0.0
  %1454 = vmatprep.subr.mxu0 0.0
  %1455 = vmatpush2.msra.mxu0 0.0
  %1456 = vmatprep.subr.mxu0 0.0
  %1457 = vmatpush2.msra.mxu0 0.0
  %1458 = vmatprep.subr.mxu0 0.0
  %1459 = vmatpush2.msra.mxu0 0.0
  %1460 = vmatprep.mubr.f32.mxu0 0.0
  %v1461 = vand.u32 %v1080, 4294901760
  %v1462 = vsub.f32 %v1080, %v1461
  %v1463 = vand.u32 %v1462, 4294901760
  %1464 = vmatmul.mubr.f32.gmra.mxu0 %v1463
  %v1465 = vpop.f32.mrf.mxu0
  %v1466 = vadd.f32 %v1370, %v1465
  %v1467 = vpop.f32.mrf.mxu0
  %1468 = vmatprep.mubr.f32.mxu0 0.0
  %v1469 = vand.u32 %v1083, 4294901760
  %v1470 = vsub.f32 %v1083, %v1469
  %v1471 = vand.u32 %v1470, 4294901760
  %1472 = vmatmul.mubr.f32.gmra.mxu0 %v1471
  %v1473 = vpop.f32.mrf.mxu0
  %v1474 = vadd.f32 %v1377, %v1473
  %v1475 = vpop.f32.mrf.mxu0
  %1476 = vmatprep.mubr.f32.mxu0 0.0
  %v1477 = vand.u32 %v1086, 4294901760
  %v1478 = vsub.f32 %v1086, %v1477
  %v1479 = vand.u32 %v1478, 4294901760
  %1480 = vmatmul.mubr.f32.gmra.mxu0 %v1479
  %v1481 = vpop.f32.mrf.mxu0
  %v1482 = vadd.f32 %v1384, %v1481
  %v1483 = vpop.f32.mrf.mxu0
  %1484 = vmatprep.mubr.f32.mxu0 0.0
  %v1485 = vand.u32 %v1089, 4294901760
  %v1486 = vsub.f32 %v1089, %v1485
  %v1487 = vand.u32 %v1486, 4294901760
  %1488 = vmatmul.mubr.f32.gmra.mxu0 %v1487
  %v1489 = vpop.f32.mrf.mxu0
  %v1490 = vadd.f32 %v1391, %v1489
  %v1491 = vpop.f32.mrf.mxu0
  %1492 = vdwg.mxu0
  %1493 = vmatprep.subr.mxu0 0.0
  %1494 = vmatpush1.msra.mxu0 0.0
  %1495 = vmatprep.subr.mxu0 0.0
  %1496 = vmatpush1.msra.mxu0 0.0
  %1497 = vmatprep.subr.mxu0 0.0
  %1498 = vmatpush1.msra.mxu0 0.0
  %1499 = vmatprep.subr.mxu0 0.0
  %1500 = vmatpush1.msra.mxu0 0.0
  %1501 = vmatprep.subr.mxu0 0.0
  %1502 = vmatpush1.msra.mxu0 0.0
  %1503 = vmatprep.subr.mxu0 0.0
  %1504 = vmatpush1.msra.mxu0 0.0
  %1505 = vmatprep.subr.mxu0 0.0
  %1506 = vmatpush1.msra.mxu0 0.0
  %1507 = vmatprep.subr.mxu0 0.0
  %1508 = vmatpush1.msra.mxu0 0.0
  %1509 = vmatprep.subr.mxu0 0.0
  %1510 = vmatpush1.msra.mxu0 0.0
  %1511 = vmatprep.subr.mxu0 0.0
  %1512 = vmatpush1.msra.mxu0 0.0
  %1513 = vmatprep.subr.mxu0 0.0
  %1514 = vmatpush1.msra.mxu0 0.0
  %1515 = vmatprep.subr.mxu0 0.0
  %1516 = vmatpush1.msra.mxu0 0.0
  %1517 = vmatprep.subr.mxu0 0.0
  %1518 = vmatpush1.msra.mxu0 0.0
  %1519 = vmatprep.subr.mxu0 0.0
  %1520 = vmatpush1.msra.mxu0 0.0
  %1521 = vmatprep.subr.mxu0 0.0
  %v1522 = vand.u32 %v271, 4294901760
  %v1523 = vsub.f32 %v271, %v1522
  %v1524 = vand.u32 %v1523, 4294901760
  %1525 = vmatpush1.msra.mxu0 %v1524
  %1526 = vmatprep.subr.mxu0 0.0
  %v1527 = vand.u32 %v167, 4294901760
  %v1528 = vsub.f32 %v167, %v1527
  %v1529 = vand.u32 %v1528, 4294901760
  %1530 = vmatpush1.msra.mxu0 %v1529
  %1531 = vmatprep.subr.mxu0 0.0
  %1532 = vmatpush2.msra.mxu0 0.0
  %1533 = vmatprep.subr.mxu0 0.0
  %1534 = vmatpush2.msra.mxu0 0.0
  %1535 = vmatprep.subr.mxu0 0.0
  %1536 = vmatpush2.msra.mxu0 0.0
  %1537 = vmatprep.subr.mxu0 0.0
  %1538 = vmatpush2.msra.mxu0 0.0
  %1539 = vmatprep.subr.mxu0 0.0
  %1540 = vmatpush2.msra.mxu0 0.0
  %1541 = vmatprep.subr.mxu0 0.0
  %1542 = vmatpush2.msra.mxu0 0.0
  %1543 = vmatprep.subr.mxu0 0.0
  %1544 = vmatpush2.msra.mxu0 0.0
  %1545 = vmatprep.subr.mxu0 0.0
  %1546 = vmatpush2.msra.mxu0 0.0
  %1547 = vmatprep.subr.mxu0 0.0
  %1548 = vmatpush2.msra.mxu0 0.0
  %1549 = vmatprep.subr.mxu0 0.0
  %1550 = vmatpush2.msra.mxu0 0.0
  %1551 = vmatprep.subr.mxu0 0.0
  %1552 = vmatpush2.msra.mxu0 0.0
  %1553 = vmatprep.subr.mxu0 0.0
  %1554 = vmatpush2.msra.mxu0 0.0
  %1555 = vmatprep.subr.mxu0 0.0
  %1556 = vmatpush2.msra.mxu0 0.0
  %1557 = vmatprep.subr.mxu0 0.0
  %1558 = vmatpush2.msra.mxu0 0.0
  %1559 = vmatprep.subr.mxu0 0.0
  %1560 = vmatpush2.msra.mxu0 0.0
  %1561 = vmatprep.subr.mxu0 0.0
  %1562 = vmatpush2.msra.mxu0 0.0
  %1563 = vmatprep.mubr.f32.mxu0 0.0
  %v1564 = vand.u32 %v1080, 4294901760
  %1565 = vmatmul.mubr.f32.gmra.mxu0 %v1564
  %v1566 = vpop.f32.mrf.mxu0
  %v1567 = vadd.f32 %v1466, %v1566
  %v1568 = vpop.f32.mrf.mxu0
  %1569 = vmatprep.mubr.f32.mxu0 0.0
  %v1570 = vand.u32 %v1083, 4294901760
  %1571 = vmatmul.mubr.f32.gmra.mxu0 %v1570
  %v1572 = vpop.f32.mrf.mxu0
  %v1573 = vadd.f32 %v1474, %v1572
  %v1574 = vpop.f32.mrf.mxu0
  %1575 = vmatprep.mubr.f32.mxu0 0.0
  %v1576 = vand.u32 %v1086, 4294901760
  %1577 = vmatmul.mubr.f32.gmra.mxu0 %v1576
  %v1578 = vpop.f32.mrf.mxu0
  %v1579 = vadd.f32 %v1482, %v1578
  %v1580 = vpop.f32.mrf.mxu0
  %1581 = vmatprep.mubr.f32.mxu0 0.0
  %v1582 = vand.u32 %v1089, 4294901760
  %1583 = vmatmul.mubr.f32.gmra.mxu0 %v1582
  %v1584 = vpop.f32.mrf.mxu0
  %v1585 = vadd.f32 %v1490, %v1584
  %v1586 = vpop.f32.mrf.mxu0
  %1587 = vdwg.mxu0
  %1588 = vmatprep.subr.mxu0 0.0
  %1589 = vmatpush1.msra.mxu0 0.0
  %1590 = vmatprep.subr.mxu0 0.0
  %1591 = vmatpush1.msra.mxu0 0.0
  %1592 = vmatprep.subr.mxu0 0.0
  %1593 = vmatpush1.msra.mxu0 0.0
  %1594 = vmatprep.subr.mxu0 0.0
  %1595 = vmatpush1.msra.mxu0 0.0
  %1596 = vmatprep.subr.mxu0 0.0
  %1597 = vmatpush1.msra.mxu0 0.0
  %1598 = vmatprep.subr.mxu0 0.0
  %1599 = vmatpush1.msra.mxu0 0.0
  %1600 = vmatprep.subr.mxu0 0.0
  %1601 = vmatpush1.msra.mxu0 0.0
  %1602 = vmatprep.subr.mxu0 0.0
  %1603 = vmatpush1.msra.mxu0 0.0
  %1604 = vmatprep.subr.mxu0 0.0
  %1605 = vmatpush1.msra.mxu0 0.0
  %1606 = vmatprep.subr.mxu0 0.0
  %1607 = vmatpush1.msra.mxu0 0.0
  %1608 = vmatprep.subr.mxu0 0.0
  %1609 = vmatpush1.msra.mxu0 0.0
  %1610 = vmatprep.subr.mxu0 0.0
  %1611 = vmatpush1.msra.mxu0 0.0
  %1612 = vmatprep.subr.mxu0 0.0
  %1613 = vmatpush1.msra.mxu0 0.0
  %1614 = vmatprep.subr.mxu0 0.0
  %1615 = vmatpush1.msra.mxu0 0.0
  %1616 = vmatprep.subr.mxu0 0.0
  %v1617 = vand.u32 %v271, 4294901760
  %1618 = vmatpush1.msra.mxu0 %v1617
  %1619 = vmatprep.subr.mxu0 0.0
  %v1620 = vand.u32 %v167, 4294901760
  %1621 = vmatpush1.msra.mxu0 %v1620
  %1622 = vmatprep.subr.mxu0 0.0
  %1623 = vmatpush2.msra.mxu0 0.0
  %1624 = vmatprep.subr.mxu0 0.0
  %1625 = vmatpush2.msra.mxu0 0.0
  %1626 = vmatprep.subr.mxu0 0.0
  %1627 = vmatpush2.msra.mxu0 0.0
  %1628 = vmatprep.subr.mxu0 0.0
  %1629 = vmatpush2.msra.mxu0 0.0
  %1630 = vmatprep.subr.mxu0 0.0
  %1631 = vmatpush2.msra.mxu0 0.0
  %1632 = vmatprep.subr.mxu0 0.0
  %1633 = vmatpush2.msra.mxu0 0.0
  %1634 = vmatprep.subr.mxu0 0.0
  %1635 = vmatpush2.msra.mxu0 0.0
  %1636 = vmatprep.subr.mxu0 0.0
  %1637 = vmatpush2.msra.mxu0 0.0
  %1638 = vmatprep.subr.mxu0 0.0
  %1639 = vmatpush2.msra.mxu0 0.0
  %1640 = vmatprep.subr.mxu0 0.0
  %1641 = vmatpush2.msra.mxu0 0.0
  %1642 = vmatprep.subr.mxu0 0.0
  %1643 = vmatpush2.msra.mxu0 0.0
  %1644 = vmatprep.subr.mxu0 0.0
  %1645 = vmatpush2.msra.mxu0 0.0
  %1646 = vmatprep.subr.mxu0 0.0
  %1647 = vmatpush2.msra.mxu0 0.0
  %1648 = vmatprep.subr.mxu0 0.0
  %1649 = vmatpush2.msra.mxu0 0.0
  %1650 = vmatprep.subr.mxu0 0.0
  %1651 = vmatpush2.msra.mxu0 0.0
  %1652 = vmatprep.subr.mxu0 0.0
  %1653 = vmatpush2.msra.mxu0 0.0
  %1654 = vmatprep.mubr.f32.mxu0 0.0
  %v1655 = vand.u32 %v1080, 4294901760
  %1656 = vmatmul.mubr.f32.gmra.mxu0 %v1655
  %v1657 = vpop.f32.mrf.mxu0
  %v1658 = vadd.f32 %v1567, %v1657
  %v1659 = vpop.f32.mrf.mxu0
  %1660 = vmatprep.mubr.f32.mxu0 0.0
  %v1661 = vand.u32 %v1083, 4294901760
  %1662 = vmatmul.mubr.f32.gmra.mxu0 %v1661
  %v1663 = vpop.f32.mrf.mxu0
  %v1664 = vadd.f32 %v1573, %v1663
  %v1665 = vpop.f32.mrf.mxu0
  %1666 = vmatprep.mubr.f32.mxu0 0.0
  %v1667 = vand.u32 %v1086, 4294901760
  %1668 = vmatmul.mubr.f32.gmra.mxu0 %v1667
  %v1669 = vpop.f32.mrf.mxu0
  %v1670 = vadd.f32 %v1579, %v1669
  %v1671 = vpop.f32.mrf.mxu0
  %1672 = vmatprep.mubr.f32.mxu0 0.0
  %v1673 = vand.u32 %v1089, 4294901760
  %1674 = vmatmul.mubr.f32.gmra.mxu0 %v1673
  %v1675 = vpop.f32.mrf.mxu0
  %v1676 = vadd.f32 %v1585, %v1675
  %v1677 = vpop.f32.mrf.mxu0
  %1678 = vdwg.mxu0
  %1680 = vset.pattern.permute.xlu0 0
  %1681 = vperm.xlu0 %1680, %v36
  %v1682 = vpop.permute.xlu0 %1681
  %1685 = vset.pattern.permute.xlu0 0
  %1686 = vperm.xlu0 %1685, %v37
  %v1687 = vpop.permute.xlu0 %1686
  %1690 = vset.pattern.permute.xlu0 0
  %1691 = vperm.xlu0 %1690, %v38
  %v1692 = vpop.permute.xlu0 %1691
  %1695 = vset.pattern.permute.xlu0 0
  %1696 = vperm.xlu0 %1695, %v39
  %v1697 = vpop.permute.xlu0 %1696
  %v1699 = vadd.f32 %v1658, %v1682
  %v1700 = vadd.f32 %v1664, %v1687
  %v1701 = vadd.f32 %v1670, %v1692
  %v1702 = vadd.f32 %v1676, %v1697
  %v1703 = vmul.f32 %v1699, %v1699
  %v1704 = vmul.f32 %v1700, %v1700
  %v1705 = vmul.f32 %v1701, %v1701
  %v1706 = vmul.f32 %v1702, %v1702
  %v1707 = vmul.f32 %v1699, %v1703
  %v1708 = vmul.f32 %v1700, %v1704
  %v1709 = vmul.f32 %v1701, %v1705
  %v1710 = vmul.f32 %v1702, %v1706
  %v1711 = vmul.f32 %v1707, 0.044715
  %v1712 = vmul.f32 %v1708, 0.044715
  %v1713 = vmul.f32 %v1709, 0.044715
  %v1714 = vmul.f32 %v1710, 0.044715
  %v1715 = vadd.f32 %v1699, %v1711
  %v1716 = vadd.f32 %v1700, %v1712
  %v1717 = vadd.f32 %v1701, %v1713
  %v1718 = vadd.f32 %v1702, %v1714
  %v1719 = vmul.f32 %v1715, 0.7978846
  %v1720 = vmul.f32 %v1716, 0.7978846
  %v1721 = vmul.f32 %v1717, 0.7978846
  %v1722 = vmul.f32 %v1718, 0.7978846
  %v1723 = vtanh.pop %v1719
  %v1724 = vtanh.pop %v1720
  %v1725 = vtanh.pop %v1721
  %v1726 = vtanh.pop %v1722
  %v1727 = vadd.f32 %v1723, 1.0
  %v1728 = vadd.f32 %v1724, 1.0
  %v1729 = vadd.f32 %v1725, 1.0
  %v1730 = vadd.f32 %v1726, 1.0
  %v1731 = vmul.f32 %v1727, 0.5
  %v1732 = vmul.f32 %v1728, 0.5
  %v1733 = vmul.f32 %v1729, 0.5
  %v1734 = vmul.f32 %v1730, 0.5
  %v1735 = vmul.f32 %v1699, %v1731
  %v1736 = vmul.f32 %v1700, %v1732
  %v1737 = vmul.f32 %v1701, %v1733
  %v1738 = vmul.f32 %v1702, %v1734
  %v1740 = vlaneseq
  %v1741 = vshrl.u32 %v1740, 7
  %v1742 = vsub.s32 0, %v1741
  %v1743 = vrot.slane %v44, %v1742
  %1745 = vxpose.xlu0.b32.start [1/16] %v1735, 128
  %1746 = vxpose.xlu0.b32.cont [2/16] %v1736, 128
  %1747 = vxpose.xlu0.b32.cont [3/16] %v1737, 128
  %1748 = vxpose.xlu0.b32.cont [4/16] %v1738, 128
  %1749 = vxpose.xlu0.b32.cont [5/16] 0.0, 128
  %1750 = vxpose.xlu0.b32.cont [6/16] 0.0, 128
  %1751 = vxpose.xlu0.b32.cont [7/16] 0.0, 128
  %1752 = vxpose.xlu0.b32.cont [8/16] 0.0, 128
  %1753 = vxpose.xlu0.b32.cont [9/16] 0.0, 128
  %1754 = vxpose.xlu0.b32.cont [10/16] 0.0, 128
  %1755 = vxpose.xlu0.b32.cont [11/16] 0.0, 128
  %1756 = vxpose.xlu0.b32.cont [12/16] 0.0, 128
  %1757 = vxpose.xlu0.b32.cont [13/16] 0.0, 128
  %1758 = vxpose.xlu0.b32.cont [14/16] 0.0, 128
  %1759 = vxpose.xlu0.b32.cont [15/16] 0.0, 128
  %1760 = vxpose.xlu0.b32.end [16/16] 0.0, 128
  %v1761 = vpop.trf.xlu0
  %v1762 = vpop.trf.xlu0
  %v1763 = vpop.trf.xlu0
  %v1764 = vpop.trf.xlu0
  %v1765 = vpop.trf.xlu0
  %v1766 = vpop.trf.xlu0
  %v1767 = vpop.trf.xlu0
  %v1768 = vpop.trf.xlu0
  %v1769 = vpop.trf.xlu0
  %v1770 = vpop.trf.xlu0
  %v1771 = vpop.trf.xlu0
  %v1772 = vpop.trf.xlu0
  %v1773 = vpop.trf.xlu0
  %v1774 = vpop.trf.xlu0
  %v1775 = vpop.trf.xlu0
  %v1776 = vpop.trf.xlu0
  %vm1777 = vcmask 261120
  %v1779 = vsel %vm1777, %v1761, 0
  %v1782 = vsel %vm1777, %v1762, 0
  %v1785 = vsel %vm1777, %v1763, 0
  %v1788 = vsel %vm1777, %v1764, 0
  %v1791 = vsel %vm1777, %v1765, 0
  %v1794 = vsel %vm1777, %v1766, 0
  %v1797 = vsel %vm1777, %v1767, 0
  %v1800 = vsel %vm1777, %v1768, 0
  %v1803 = vsel %vm1777, %v1769, 0
  %v1806 = vsel %vm1777, %v1770, 0
  %v1809 = vsel %vm1777, %v1771, 0
  %v1812 = vsel %vm1777, %v1772, 0
  %v1815 = vsel %vm1777, %v1773, 0
  %v1818 = vsel %vm1777, %v1774, 0
  %v1821 = vsel %vm1777, %v1775, 0
  %v1824 = vsel %vm1777, %v1776, 0
  %v1827 = vsel %vm1777, %v40, 0
  %v1830 = vsel %vm1777, %v41, 0
  %v1833 = vsel %vm1777, %v42, 0
  %v1836 = vsel %vm1777, %v43, 0
  %1838 = vmatprep.subr.mxu0 0.0
  %1839 = vmatpush1.xpose.msra.mxu0 0.0
  %1840 = vmatprep.subr.mxu0 0.0
  %1841 = vmatpush1.xpose.msra.mxu0 0.0
  %1842 = vmatprep.subr.mxu0 0.0
  %1843 = vmatpush1.xpose.msra.mxu0 0.0
  %1844 = vmatprep.subr.mxu0 0.0
  %1845 = vmatpush1.xpose.msra.mxu0 0.0
  %1846 = vmatprep.subr.mxu0 0.0
  %1847 = vmatpush1.xpose.msra.mxu0 0.0
  %1848 = vmatprep.subr.mxu0 0.0
  %1849 = vmatpush1.xpose.msra.mxu0 0.0
  %1850 = vmatprep.subr.mxu0 0.0
  %1851 = vmatpush1.xpose.msra.mxu0 0.0
  %1852 = vmatprep.subr.mxu0 0.0
  %1853 = vmatpush1.xpose.msra.mxu0 0.0
  %1854 = vmatprep.subr.mxu0 0.0
  %1855 = vmatpush1.xpose.msra.mxu0 0.0
  %1856 = vmatprep.subr.mxu0 0.0
  %1857 = vmatpush1.xpose.msra.mxu0 0.0
  %1858 = vmatprep.subr.mxu0 0.0
  %1859 = vmatpush1.xpose.msra.mxu0 0.0
  %1860 = vmatprep.subr.mxu0 0.0
  %1861 = vmatpush1.xpose.msra.mxu0 0.0
  %1862 = vmatprep.subr.mxu0 0.0
  %v1863 = vand.u32 %v1836, 4294901760
  %1864 = vmatpush1.xpose.msra.mxu0 %v1863
  %1865 = vmatprep.subr.mxu0 0.0
  %v1866 = vand.u32 %v1833, 4294901760
  %1867 = vmatpush1.xpose.msra.mxu0 %v1866
  %1868 = vmatprep.subr.mxu0 0.0
  %v1869 = vand.u32 %v1830, 4294901760
  %1870 = vmatpush1.xpose.msra.mxu0 %v1869
  %1871 = vmatprep.subr.mxu0 0.0
  %v1872 = vand.u32 %v1827, 4294901760
  %1873 = vmatpush1.xpose.msra.mxu0 %v1872
  %1874 = vmatprep.subr.mxu0 0.0
  %1875 = vmatpush2.xpose.msra.mxu0 0.0
  %1876 = vmatprep.subr.mxu0 0.0
  %1877 = vmatpush2.xpose.msra.mxu0 0.0
  %1878 = vmatprep.subr.mxu0 0.0
  %1879 = vmatpush2.xpose.msra.mxu0 0.0
  %1880 = vmatprep.subr.mxu0 0.0
  %1881 = vmatpush2.xpose.msra.mxu0 0.0
  %1882 = vmatprep.subr.mxu0 0.0
  %1883 = vmatpush2.xpose.msra.mxu0 0.0
  %1884 = vmatprep.subr.mxu0 0.0
  %1885 = vmatpush2.xpose.msra.mxu0 0.0
  %1886 = vmatprep.subr.mxu0 0.0
  %1887 = vmatpush2.xpose.msra.mxu0 0.0
  %1888 = vmatprep.subr.mxu0 0.0
  %1889 = vmatpush2.xpose.msra.mxu0 0.0
  %1890 = vmatprep.subr.mxu0 0.0
  %1891 = vmatpush2.xpose.msra.mxu0 0.0
  %1892 = vmatprep.subr.mxu0 0.0
  %1893 = vmatpush2.xpose.msra.mxu0 0.0
  %1894 = vmatprep.subr.mxu0 0.0
  %1895 = vmatpush2.xpose.msra.mxu0 0.0
  %1896 = vmatprep.subr.mxu0 0.0
  %1897 = vmatpush2.xpose.msra.mxu0 0.0
  %1898 = vmatprep.subr.mxu0 0.0
  %1899 = vmatpush2.xpose.msra.mxu0 0.0
  %1900 = vmatprep.subr.mxu0 0.0
  %1901 = vmatpush2.xpose.msra.mxu0 0.0
  %1902 = vmatprep.subr.mxu0 0.0
  %1903 = vmatpush2.xpose.msra.mxu0 0.0
  %1904 = vmatprep.subr.mxu0 0.0
  %1905 = vmatpush2.xpose.msra.mxu0 0.0
  %1906 = vmatprep.mubr.f32.mxu0 0.0
  %v1907 = vand.u32 %v1779, 4294901760
  %v1908 = vsub.f32 %v1779, %v1907
  %v1909 = vand.u32 %v1908, 4294901760
  %v1910 = vsub.f32 %v1908, %v1909
  %v1911 = vand.u32 %v1910, 4294901760
  %1912 = vmatmul.mubr.f32.gmra.mxu0 %v1911
  %v1913 = vpop.f32.mrf.mxu0
  %v1914 = vadd.f32 %v1743, %v1913
  %v1915 = vpop.f32.mrf.mxu0
  %1916 = vmatprep.mubr.f32.mxu0 0.0
  %v1917 = vand.u32 %v1782, 4294901760
  %v1918 = vsub.f32 %v1782, %v1917
  %v1919 = vand.u32 %v1918, 4294901760
  %v1920 = vsub.f32 %v1918, %v1919
  %v1921 = vand.u32 %v1920, 4294901760
  %1922 = vmatmul.mubr.f32.gmra.mxu0 %v1921
  %v1923 = vpop.f32.mrf.mxu0
  %v1924 = vadd.f32 %v1743, %v1923
  %v1925 = vpop.f32.mrf.mxu0
  %1926 = vmatprep.mubr.f32.mxu0 0.0
  %v1927 = vand.u32 %v1785, 4294901760
  %v1928 = vsub.f32 %v1785, %v1927
  %v1929 = vand.u32 %v1928, 4294901760
  %v1930 = vsub.f32 %v1928, %v1929
  %v1931 = vand.u32 %v1930, 4294901760
  %1932 = vmatmul.mubr.f32.gmra.mxu0 %v1931
  %v1933 = vpop.f32.mrf.mxu0
  %v1934 = vadd.f32 %v1743, %v1933
  %v1935 = vpop.f32.mrf.mxu0
  %1936 = vmatprep.mubr.f32.mxu0 0.0
  %v1937 = vand.u32 %v1788, 4294901760
  %v1938 = vsub.f32 %v1788, %v1937
  %v1939 = vand.u32 %v1938, 4294901760
  %v1940 = vsub.f32 %v1938, %v1939
  %v1941 = vand.u32 %v1940, 4294901760
  %1942 = vmatmul.mubr.f32.gmra.mxu0 %v1941
  %v1943 = vpop.f32.mrf.mxu0
  %v1944 = vadd.f32 %v1743, %v1943
  %v1945 = vpop.f32.mrf.mxu0
  %1946 = vmatprep.mubr.f32.mxu0 0.0
  %v1947 = vand.u32 %v1791, 4294901760
  %v1948 = vsub.f32 %v1791, %v1947
  %v1949 = vand.u32 %v1948, 4294901760
  %v1950 = vsub.f32 %v1948, %v1949
  %v1951 = vand.u32 %v1950, 4294901760
  %1952 = vmatmul.mubr.f32.gmra.mxu0 %v1951
  %v1953 = vpop.f32.mrf.mxu0
  %v1954 = vadd.f32 %v1743, %v1953
  %v1955 = vpop.f32.mrf.mxu0
  %1956 = vmatprep.mubr.f32.mxu0 0.0
  %v1957 = vand.u32 %v1794, 4294901760
  %v1958 = vsub.f32 %v1794, %v1957
  %v1959 = vand.u32 %v1958, 4294901760
  %v1960 = vsub.f32 %v1958, %v1959
  %v1961 = vand.u32 %v1960, 4294901760
  %1962 = vmatmul.mubr.f32.gmra.mxu0 %v1961
  %v1963 = vpop.f32.mrf.mxu0
  %v1964 = vadd.f32 %v1743, %v1963
  %v1965 = vpop.f32.mrf.mxu0
  %1966 = vmatprep.mubr.f32.mxu0 0.0
  %v1967 = vand.u32 %v1797, 4294901760
  %v1968 = vsub.f32 %v1797, %v1967
  %v1969 = vand.u32 %v1968, 4294901760
  %v1970 = vsub.f32 %v1968, %v1969
  %v1971 = vand.u32 %v1970, 4294901760
  %1972 = vmatmul.mubr.f32.gmra.mxu0 %v1971
  %v1973 = vpop.f32.mrf.mxu0
  %v1974 = vadd.f32 %v1743, %v1973
  %v1975 = vpop.f32.mrf.mxu0
  %1976 = vmatprep.mubr.f32.mxu0 0.0
  %v1977 = vand.u32 %v1800, 4294901760
  %v1978 = vsub.f32 %v1800, %v1977
  %v1979 = vand.u32 %v1978, 4294901760
  %v1980 = vsub.f32 %v1978, %v1979
  %v1981 = vand.u32 %v1980, 4294901760
  %1982 = vmatmul.mubr.f32.gmra.mxu0 %v1981
  %v1983 = vpop.f32.mrf.mxu0
  %v1984 = vadd.f32 %v1743, %v1983
  %v1985 = vpop.f32.mrf.mxu0
  %1986 = vmatprep.mubr.f32.mxu0 0.0
  %v1987 = vand.u32 %v1803, 4294901760
  %v1988 = vsub.f32 %v1803, %v1987
  %v1989 = vand.u32 %v1988, 4294901760
  %v1990 = vsub.f32 %v1988, %v1989
  %v1991 = vand.u32 %v1990, 4294901760
  %1992 = vmatmul.mubr.f32.gmra.mxu0 %v1991
  %v1993 = vpop.f32.mrf.mxu0
  %v1994 = vadd.f32 %v1743, %v1993
  %v1995 = vpop.f32.mrf.mxu0
  %1996 = vmatprep.mubr.f32.mxu0 0.0
  %v1997 = vand.u32 %v1806, 4294901760
  %v1998 = vsub.f32 %v1806, %v1997
  %v1999 = vand.u32 %v1998, 4294901760
  %v2000 = vsub.f32 %v1998, %v1999
  %v2001 = vand.u32 %v2000, 4294901760
  %2002 = vmatmul.mubr.f32.gmra.mxu0 %v2001
  %v2003 = vpop.f32.mrf.mxu0
  %v2004 = vadd.f32 %v1743, %v2003
  %v2005 = vpop.f32.mrf.mxu0
  %2006 = vmatprep.mubr.f32.mxu0 0.0
  %v2007 = vand.u32 %v1809, 4294901760
  %v2008 = vsub.f32 %v1809, %v2007
  %v2009 = vand.u32 %v2008, 4294901760
  %v2010 = vsub.f32 %v2008, %v2009
  %v2011 = vand.u32 %v2010, 4294901760
  %2012 = vmatmul.mubr.f32.gmra.mxu0 %v2011
  %v2013 = vpop.f32.mrf.mxu0
  %v2014 = vadd.f32 %v1743, %v2013
  %v2015 = vpop.f32.mrf.mxu0
  %2016 = vmatprep.mubr.f32.mxu0 0.0
  %v2017 = vand.u32 %v1812, 4294901760
  %v2018 = vsub.f32 %v1812, %v2017
  %v2019 = vand.u32 %v2018, 4294901760
  %v2020 = vsub.f32 %v2018, %v2019
  %v2021 = vand.u32 %v2020, 4294901760
  %2022 = vmatmul.mubr.f32.gmra.mxu0 %v2021
  %v2023 = vpop.f32.mrf.mxu0
  %v2024 = vadd.f32 %v1743, %v2023
  %v2025 = vpop.f32.mrf.mxu0
  %2026 = vmatprep.mubr.f32.mxu0 0.0
  %v2027 = vand.u32 %v1815, 4294901760
  %v2028 = vsub.f32 %v1815, %v2027
  %v2029 = vand.u32 %v2028, 4294901760
  %v2030 = vsub.f32 %v2028, %v2029
  %v2031 = vand.u32 %v2030, 4294901760
  %2032 = vmatmul.mubr.f32.gmra.mxu0 %v2031
  %v2033 = vpop.f32.mrf.mxu0
  %v2034 = vadd.f32 %v1743, %v2033
  %v2035 = vpop.f32.mrf.mxu0
  %2036 = vmatprep.mubr.f32.mxu0 0.0
  %v2037 = vand.u32 %v1818, 4294901760
  %v2038 = vsub.f32 %v1818, %v2037
  %v2039 = vand.u32 %v2038, 4294901760
  %v2040 = vsub.f32 %v2038, %v2039
  %v2041 = vand.u32 %v2040, 4294901760
  %2042 = vmatmul.mubr.f32.gmra.mxu0 %v2041
  %v2043 = vpop.f32.mrf.mxu0
  %v2044 = vadd.f32 %v1743, %v2043
  %v2045 = vpop.f32.mrf.mxu0
  %2046 = vmatprep.mubr.f32.mxu0 0.0
  %v2047 = vand.u32 %v1821, 4294901760
  %v2048 = vsub.f32 %v1821, %v2047
  %v2049 = vand.u32 %v2048, 4294901760
  %v2050 = vsub.f32 %v2048, %v2049
  %v2051 = vand.u32 %v2050, 4294901760
  %2052 = vmatmul.mubr.f32.gmra.mxu0 %v2051
  %v2053 = vpop.f32.mrf.mxu0
  %v2054 = vadd.f32 %v1743, %v2053
  %v2055 = vpop.f32.mrf.mxu0
  %2056 = vmatprep.mubr.f32.mxu0 0.0
  %v2057 = vand.u32 %v1824, 4294901760
  %v2058 = vsub.f32 %v1824, %v2057
  %v2059 = vand.u32 %v2058, 4294901760
  %v2060 = vsub.f32 %v2058, %v2059
  %v2061 = vand.u32 %v2060, 4294901760
  %2062 = vmatmul.mubr.f32.gmra.mxu0 %v2061
  %v2063 = vpop.f32.mrf.mxu0
  %v2064 = vadd.f32 %v1743, %v2063
  %v2065 = vpop.f32.mrf.mxu0
  %2066 = vdwg.mxu0
  %2067 = vmatprep.subr.mxu0 0.0
  %2068 = vmatpush1.xpose.msra.mxu0 0.0
  %2069 = vmatprep.subr.mxu0 0.0
  %2070 = vmatpush1.xpose.msra.mxu0 0.0
  %2071 = vmatprep.subr.mxu0 0.0
  %2072 = vmatpush1.xpose.msra.mxu0 0.0
  %2073 = vmatprep.subr.mxu0 0.0
  %2074 = vmatpush1.xpose.msra.mxu0 0.0
  %2075 = vmatprep.subr.mxu0 0.0
  %2076 = vmatpush1.xpose.msra.mxu0 0.0
  %2077 = vmatprep.subr.mxu0 0.0
  %2078 = vmatpush1.xpose.msra.mxu0 0.0
  %2079 = vmatprep.subr.mxu0 0.0
  %2080 = vmatpush1.xpose.msra.mxu0 0.0
  %2081 = vmatprep.subr.mxu0 0.0
  %2082 = vmatpush1.xpose.msra.mxu0 0.0
  %2083 = vmatprep.subr.mxu0 0.0
  %2084 = vmatpush1.xpose.msra.mxu0 0.0
  %2085 = vmatprep.subr.mxu0 0.0
  %2086 = vmatpush1.xpose.msra.mxu0 0.0
  %2087 = vmatprep.subr.mxu0 0.0
  %2088 = vmatpush1.xpose.msra.mxu0 0.0
  %2089 = vmatprep.subr.mxu0 0.0
  %2090 = vmatpush1.xpose.msra.mxu0 0.0
  %2091 = vmatprep.subr.mxu0 0.0
  %v2092 = vand.u32 %v1836, 4294901760
  %v2093 = vsub.f32 %v1836, %v2092
  %v2094 = vand.u32 %v2093, 4294901760
  %v2095 = vsub.f32 %v2093, %v2094
  %v2096 = vand.u32 %v2095, 4294901760
  %2097 = vmatpush1.xpose.msra.mxu0 %v2096
  %2098 = vmatprep.subr.mxu0 0.0
  %v2099 = vand.u32 %v1833, 4294901760
  %v2100 = vsub.f32 %v1833, %v2099
  %v2101 = vand.u32 %v2100, 4294901760
  %v2102 = vsub.f32 %v2100, %v2101
  %v2103 = vand.u32 %v2102, 4294901760
  %2104 = vmatpush1.xpose.msra.mxu0 %v2103
  %2105 = vmatprep.subr.mxu0 0.0
  %v2106 = vand.u32 %v1830, 4294901760
  %v2107 = vsub.f32 %v1830, %v2106
  %v2108 = vand.u32 %v2107, 4294901760
  %v2109 = vsub.f32 %v2107, %v2108
  %v2110 = vand.u32 %v2109, 4294901760
  %2111 = vmatpush1.xpose.msra.mxu0 %v2110
  %2112 = vmatprep.subr.mxu0 0.0
  %v2113 = vand.u32 %v1827, 4294901760
  %v2114 = vsub.f32 %v1827, %v2113
  %v2115 = vand.u32 %v2114, 4294901760
  %v2116 = vsub.f32 %v2114, %v2115
  %v2117 = vand.u32 %v2116, 4294901760
  %2118 = vmatpush1.xpose.msra.mxu0 %v2117
  %2119 = vmatprep.subr.mxu0 0.0
  %2120 = vmatpush2.xpose.msra.mxu0 0.0
  %2121 = vmatprep.subr.mxu0 0.0
  %2122 = vmatpush2.xpose.msra.mxu0 0.0
  %2123 = vmatprep.subr.mxu0 0.0
  %2124 = vmatpush2.xpose.msra.mxu0 0.0
  %2125 = vmatprep.subr.mxu0 0.0
  %2126 = vmatpush2.xpose.msra.mxu0 0.0
  %2127 = vmatprep.subr.mxu0 0.0
  %2128 = vmatpush2.xpose.msra.mxu0 0.0
  %2129 = vmatprep.subr.mxu0 0.0
  %2130 = vmatpush2.xpose.msra.mxu0 0.0
  %2131 = vmatprep.subr.mxu0 0.0
  %2132 = vmatpush2.xpose.msra.mxu0 0.0
  %2133 = vmatprep.subr.mxu0 0.0
  %2134 = vmatpush2.xpose.msra.mxu0 0.0
  %2135 = vmatprep.subr.mxu0 0.0
  %2136 = vmatpush2.xpose.msra.mxu0 0.0
  %2137 = vmatprep.subr.mxu0 0.0
  %2138 = vmatpush2.xpose.msra.mxu0 0.0
  %2139 = vmatprep.subr.mxu0 0.0
  %2140 = vmatpush2.xpose.msra.mxu0 0.0
  %2141 = vmatprep.subr.mxu0 0.0
  %2142 = vmatpush2.xpose.msra.mxu0 0.0
  %2143 = vmatprep.subr.mxu0 0.0
  %2144 = vmatpush2.xpose.msra.mxu0 0.0
  %2145 = vmatprep.subr.mxu0 0.0
  %2146 = vmatpush2.xpose.msra.mxu0 0.0
  %2147 = vmatprep.subr.mxu0 0.0
  %2148 = vmatpush2.xpose.msra.mxu0 0.0
  %2149 = vmatprep.subr.mxu0 0.0
  %2150 = vmatpush2.xpose.msra.mxu0 0.0
  %2151 = vmatprep.mubr.f32.mxu0 0.0
  %v2152 = vand.u32 %v1779, 4294901760
  %2153 = vmatmul.mubr.f32.gmra.mxu0 %v2152
  %v2154 = vpop.f32.mrf.mxu0
  %v2155 = vadd.f32 %v1914, %v2154
  %v2156 = vpop.f32.mrf.mxu0
  %2157 = vmatprep.mubr.f32.mxu0 0.0
  %v2158 = vand.u32 %v1782, 4294901760
  %2159 = vmatmul.mubr.f32.gmra.mxu0 %v2158
  %v2160 = vpop.f32.mrf.mxu0
  %v2161 = vadd.f32 %v1924, %v2160
  %v2162 = vpop.f32.mrf.mxu0
  %2163 = vmatprep.mubr.f32.mxu0 0.0
  %v2164 = vand.u32 %v1785, 4294901760
  %2165 = vmatmul.mubr.f32.gmra.mxu0 %v2164
  %v2166 = vpop.f32.mrf.mxu0
  %v2167 = vadd.f32 %v1934, %v2166
  %v2168 = vpop.f32.mrf.mxu0
  %2169 = vmatprep.mubr.f32.mxu0 0.0
  %v2170 = vand.u32 %v1788, 4294901760
  %2171 = vmatmul.mubr.f32.gmra.mxu0 %v2170
  %v2172 = vpop.f32.mrf.mxu0
  %v2173 = vadd.f32 %v1944, %v2172
  %v2174 = vpop.f32.mrf.mxu0
  %2175 = vmatprep.mubr.f32.mxu0 0.0
  %v2176 = vand.u32 %v1791, 4294901760
  %2177 = vmatmul.mubr.f32.gmra.mxu0 %v2176
  %v2178 = vpop.f32.mrf.mxu0
  %v2179 = vadd.f32 %v1954, %v2178
  %v2180 = vpop.f32.mrf.mxu0
  %2181 = vmatprep.mubr.f32.mxu0 0.0
  %v2182 = vand.u32 %v1794, 4294901760
  %2183 = vmatmul.mubr.f32.gmra.mxu0 %v2182
  %v2184 = vpop.f32.mrf.mxu0
  %v2185 = vadd.f32 %v1964, %v2184
  %v2186 = vpop.f32.mrf.mxu0
  %2187 = vmatprep.mubr.f32.mxu0 0.0
  %v2188 = vand.u32 %v1797, 4294901760
  %2189 = vmatmul.mubr.f32.gmra.mxu0 %v2188
  %v2190 = vpop.f32.mrf.mxu0
  %v2191 = vadd.f32 %v1974, %v2190
  %v2192 = vpop.f32.mrf.mxu0
  %2193 = vmatprep.mubr.f32.mxu0 0.0
  %v2194 = vand.u32 %v1800, 4294901760
  %2195 = vmatmul.mubr.f32.gmra.mxu0 %v2194
  %v2196 = vpop.f32.mrf.mxu0
  %v2197 = vadd.f32 %v1984, %v2196
  %v2198 = vpop.f32.mrf.mxu0
  %2199 = vmatprep.mubr.f32.mxu0 0.0
  %v2200 = vand.u32 %v1803, 4294901760
  %2201 = vmatmul.mubr.f32.gmra.mxu0 %v2200
  %v2202 = vpop.f32.mrf.mxu0
  %v2203 = vadd.f32 %v1994, %v2202
  %v2204 = vpop.f32.mrf.mxu0
  %2205 = vmatprep.mubr.f32.mxu0 0.0
  %v2206 = vand.u32 %v1806, 4294901760
  %2207 = vmatmul.mubr.f32.gmra.mxu0 %v2206
  %v2208 = vpop.f32.mrf.mxu0
  %v2209 = vadd.f32 %v2004, %v2208
  %v2210 = vpop.f32.mrf.mxu0
  %2211 = vmatprep.mubr.f32.mxu0 0.0
  %v2212 = vand.u32 %v1809, 4294901760
  %2213 = vmatmul.mubr.f32.gmra.mxu0 %v2212
  %v2214 = vpop.f32.mrf.mxu0
  %v2215 = vadd.f32 %v2014, %v2214
  %v2216 = vpop.f32.mrf.mxu0
  %2217 = vmatprep.mubr.f32.mxu0 0.0
  %v2218 = vand.u32 %v1812, 4294901760
  %2219 = vmatmul.mubr.f32.gmra.mxu0 %v2218
  %v2220 = vpop.f32.mrf.mxu0
  %v2221 = vadd.f32 %v2024, %v2220
  %v2222 = vpop.f32.mrf.mxu0
  %2223 = vmatprep.mubr.f32.mxu0 0.0
  %v2224 = vand.u32 %v1815, 4294901760
  %2225 = vmatmul.mubr.f32.gmra.mxu0 %v2224
  %v2226 = vpop.f32.mrf.mxu0
  %v2227 = vadd.f32 %v2034, %v2226
  %v2228 = vpop.f32.mrf.mxu0
  %2229 = vmatprep.mubr.f32.mxu0 0.0
  %v2230 = vand.u32 %v1818, 4294901760
  %2231 = vmatmul.mubr.f32.gmra.mxu0 %v2230
  %v2232 = vpop.f32.mrf.mxu0
  %v2233 = vadd.f32 %v2044, %v2232
  %v2234 = vpop.f32.mrf.mxu0
  %2235 = vmatprep.mubr.f32.mxu0 0.0
  %v2236 = vand.u32 %v1821, 4294901760
  %2237 = vmatmul.mubr.f32.gmra.mxu0 %v2236
  %v2238 = vpop.f32.mrf.mxu0
  %v2239 = vadd.f32 %v2054, %v2238
  %v2240 = vpop.f32.mrf.mxu0
  %2241 = vmatprep.mubr.f32.mxu0 0.0
  %v2242 = vand.u32 %v1824, 4294901760
  %2243 = vmatmul.mubr.f32.gmra.mxu0 %v2242
  %v2244 = vpop.f32.mrf.mxu0
  %v2245 = vadd.f32 %v2064, %v2244
  %v2246 = vpop.f32.mrf.mxu0
  %2247 = vdwg.mxu0
  %2248 = vmatprep.subr.mxu0 0.0
  %2249 = vmatpush1.xpose.msra.mxu0 0.0
  %2250 = vmatprep.subr.mxu0 0.0
  %2251 = vmatpush1.xpose.msra.mxu0 0.0
  %2252 = vmatprep.subr.mxu0 0.0
  %2253 = vmatpush1.xpose.msra.mxu0 0.0
  %2254 = vmatprep.subr.mxu0 0.0
  %2255 = vmatpush1.xpose.msra.mxu0 0.0
  %2256 = vmatprep.subr.mxu0 0.0
  %2257 = vmatpush1.xpose.msra.mxu0 0.0
  %2258 = vmatprep.subr.mxu0 0.0
  %2259 = vmatpush1.xpose.msra.mxu0 0.0
  %2260 = vmatprep.subr.mxu0 0.0
  %2261 = vmatpush1.xpose.msra.mxu0 0.0
  %2262 = vmatprep.subr.mxu0 0.0
  %2263 = vmatpush1.xpose.msra.mxu0 0.0
  %2264 = vmatprep.subr.mxu0 0.0
  %2265 = vmatpush1.xpose.msra.mxu0 0.0
  %2266 = vmatprep.subr.mxu0 0.0
  %2267 = vmatpush1.xpose.msra.mxu0 0.0
  %2268 = vmatprep.subr.mxu0 0.0
  %2269 = vmatpush1.xpose.msra.mxu0 0.0
  %2270 = vmatprep.subr.mxu0 0.0
  %2271 = vmatpush1.xpose.msra.mxu0 0.0
  %2272 = vmatprep.subr.mxu0 0.0
  %v2273 = vand.u32 %v1836, 4294901760
  %v2274 = vsub.f32 %v1836, %v2273
  %2275 = vmatpush1.xpose.msra.mxu0 %v2274
  %2276 = vmatprep.subr.mxu0 0.0
  %v2277 = vand.u32 %v1833, 4294901760
  %v2278 = vsub.f32 %v1833, %v2277
  %2279 = vmatpush1.xpose.msra.mxu0 %v2278
  %2280 = vmatprep.subr.mxu0 0.0
  %v2281 = vand.u32 %v1830, 4294901760
  %v2282 = vsub.f32 %v1830, %v2281
  %2283 = vmatpush1.xpose.msra.mxu0 %v2282
  %2284 = vmatprep.subr.mxu0 0.0
  %v2285 = vand.u32 %v1827, 4294901760
  %v2286 = vsub.f32 %v1827, %v2285
  %2287 = vmatpush1.xpose.msra.mxu0 %v2286
  %2288 = vmatprep.subr.mxu0 0.0
  %2289 = vmatpush2.xpose.msra.mxu0 0.0
  %2290 = vmatprep.subr.mxu0 0.0
  %2291 = vmatpush2.xpose.msra.mxu0 0.0
  %2292 = vmatprep.subr.mxu0 0.0
  %2293 = vmatpush2.xpose.msra.mxu0 0.0
  %2294 = vmatprep.subr.mxu0 0.0
  %2295 = vmatpush2.xpose.msra.mxu0 0.0
  %2296 = vmatprep.subr.mxu0 0.0
  %2297 = vmatpush2.xpose.msra.mxu0 0.0
  %2298 = vmatprep.subr.mxu0 0.0
  %2299 = vmatpush2.xpose.msra.mxu0 0.0
  %2300 = vmatprep.subr.mxu0 0.0
  %2301 = vmatpush2.xpose.msra.mxu0 0.0
  %2302 = vmatprep.subr.mxu0 0.0
  %2303 = vmatpush2.xpose.msra.mxu0 0.0
  %2304 = vmatprep.subr.mxu0 0.0
  %2305 = vmatpush2.xpose.msra.mxu0 0.0
  %2306 = vmatprep.subr.mxu0 0.0
  %2307 = vmatpush2.xpose.msra.mxu0 0.0
  %2308 = vmatprep.subr.mxu0 0.0
  %2309 = vmatpush2.xpose.msra.mxu0 0.0
  %2310 = vmatprep.subr.mxu0 0.0
  %2311 = vmatpush2.xpose.msra.mxu0 0.0
  %2312 = vmatprep.subr.mxu0 0.0
  %2313 = vmatpush2.xpose.msra.mxu0 0.0
  %2314 = vmatprep.subr.mxu0 0.0
  %2315 = vmatpush2.xpose.msra.mxu0 0.0
  %2316 = vmatprep.subr.mxu0 0.0
  %2317 = vmatpush2.xpose.msra.mxu0 0.0
  %2318 = vmatprep.subr.mxu0 0.0
  %2319 = vmatpush2.xpose.msra.mxu0 0.0
  %2320 = vmatprep.mubr.f32.mxu0 0.0
  %v2321 = vand.u32 %v1779, 4294901760
  %v2322 = vsub.f32 %v1779, %v2321
  %2323 = vmatmul.mubr.f32.gmra.mxu0 %v2322
  %v2324 = vpop.f32.mrf.mxu0
  %v2325 = vadd.f32 %v2155, %v2324
  %v2326 = vpop.f32.mrf.mxu0
  %2327 = vmatprep.mubr.f32.mxu0 0.0
  %v2328 = vand.u32 %v1782, 4294901760
  %v2329 = vsub.f32 %v1782, %v2328
  %2330 = vmatmul.mubr.f32.gmra.mxu0 %v2329
  %v2331 = vpop.f32.mrf.mxu0
  %v2332 = vadd.f32 %v2161, %v2331
  %v2333 = vpop.f32.mrf.mxu0
  %2334 = vmatprep.mubr.f32.mxu0 0.0
  %v2335 = vand.u32 %v1785, 4294901760
  %v2336 = vsub.f32 %v1785, %v2335
  %2337 = vmatmul.mubr.f32.gmra.mxu0 %v2336
  %v2338 = vpop.f32.mrf.mxu0
  %v2339 = vadd.f32 %v2167, %v2338
  %v2340 = vpop.f32.mrf.mxu0
  %2341 = vmatprep.mubr.f32.mxu0 0.0
  %v2342 = vand.u32 %v1788, 4294901760
  %v2343 = vsub.f32 %v1788, %v2342
  %2344 = vmatmul.mubr.f32.gmra.mxu0 %v2343
  %v2345 = vpop.f32.mrf.mxu0
  %v2346 = vadd.f32 %v2173, %v2345
  %v2347 = vpop.f32.mrf.mxu0
  %2348 = vmatprep.mubr.f32.mxu0 0.0
  %v2349 = vand.u32 %v1791, 4294901760
  %v2350 = vsub.f32 %v1791, %v2349
  %2351 = vmatmul.mubr.f32.gmra.mxu0 %v2350
  %v2352 = vpop.f32.mrf.mxu0
  %v2353 = vadd.f32 %v2179, %v2352
  %v2354 = vpop.f32.mrf.mxu0
  %2355 = vmatprep.mubr.f32.mxu0 0.0
  %v2356 = vand.u32 %v1794, 4294901760
  %v2357 = vsub.f32 %v1794, %v2356
  %2358 = vmatmul.mubr.f32.gmra.mxu0 %v2357
  %v2359 = vpop.f32.mrf.mxu0
  %v2360 = vadd.f32 %v2185, %v2359
  %v2361 = vpop.f32.mrf.mxu0
  %2362 = vmatprep.mubr.f32.mxu0 0.0
  %v2363 = vand.u32 %v1797, 4294901760
  %v2364 = vsub.f32 %v1797, %v2363
  %2365 = vmatmul.mubr.f32.gmra.mxu0 %v2364
  %v2366 = vpop.f32.mrf.mxu0
  %v2367 = vadd.f32 %v2191, %v2366
  %v2368 = vpop.f32.mrf.mxu0
  %2369 = vmatprep.mubr.f32.mxu0 0.0
  %v2370 = vand.u32 %v1800, 4294901760
  %v2371 = vsub.f32 %v1800, %v2370
  %2372 = vmatmul.mubr.f32.gmra.mxu0 %v2371
  %v2373 = vpop.f32.mrf.mxu0
  %v2374 = vadd.f32 %v2197, %v2373
  %v2375 = vpop.f32.mrf.mxu0
  %2376 = vmatprep.mubr.f32.mxu0 0.0
  %v2377 = vand.u32 %v1803, 4294901760
  %v2378 = vsub.f32 %v1803, %v2377
  %2379 = vmatmul.mubr.f32.gmra.mxu0 %v2378
  %v2380 = vpop.f32.mrf.mxu0
  %v2381 = vadd.f32 %v2203, %v2380
  %v2382 = vpop.f32.mrf.mxu0
  %2383 = vmatprep.mubr.f32.mxu0 0.0
  %v2384 = vand.u32 %v1806, 4294901760
  %v2385 = vsub.f32 %v1806, %v2384
  %2386 = vmatmul.mubr.f32.gmra.mxu0 %v2385
  %v2387 = vpop.f32.mrf.mxu0
  %v2388 = vadd.f32 %v2209, %v2387
  %v2389 = vpop.f32.mrf.mxu0
  %2390 = vmatprep.mubr.f32.mxu0 0.0
  %v2391 = vand.u32 %v1809, 4294901760
  %v2392 = vsub.f32 %v1809, %v2391
  %2393 = vmatmul.mubr.f32.gmra.mxu0 %v2392
  %v2394 = vpop.f32.mrf.mxu0
  %v2395 = vadd.f32 %v2215, %v2394
  %v2396 = vpop.f32.mrf.mxu0
  %2397 = vmatprep.mubr.f32.mxu0 0.0
  %v2398 = vand.u32 %v1812, 4294901760
  %v2399 = vsub.f32 %v1812, %v2398
  %2400 = vmatmul.mubr.f32.gmra.mxu0 %v2399
  %v2401 = vpop.f32.mrf.mxu0
  %v2402 = vadd.f32 %v2221, %v2401
  %v2403 = vpop.f32.mrf.mxu0
  %2404 = vmatprep.mubr.f32.mxu0 0.0
  %v2405 = vand.u32 %v1815, 4294901760
  %v2406 = vsub.f32 %v1815, %v2405
  %2407 = vmatmul.mubr.f32.gmra.mxu0 %v2406
  %v2408 = vpop.f32.mrf.mxu0
  %v2409 = vadd.f32 %v2227, %v2408
  %v2410 = vpop.f32.mrf.mxu0
  %2411 = vmatprep.mubr.f32.mxu0 0.0
  %v2412 = vand.u32 %v1818, 4294901760
  %v2413 = vsub.f32 %v1818, %v2412
  %2414 = vmatmul.mubr.f32.gmra.mxu0 %v2413
  %v2415 = vpop.f32.mrf.mxu0
  %v2416 = vadd.f32 %v2233, %v2415
  %v2417 = vpop.f32.mrf.mxu0
  %2418 = vmatprep.mubr.f32.mxu0 0.0
  %v2419 = vand.u32 %v1821, 4294901760
  %v2420 = vsub.f32 %v1821, %v2419
  %2421 = vmatmul.mubr.f32.gmra.mxu0 %v2420
  %v2422 = vpop.f32.mrf.mxu0
  %v2423 = vadd.f32 %v2239, %v2422
  %v2424 = vpop.f32.mrf.mxu0
  %2425 = vmatprep.mubr.f32.mxu0 0.0
  %v2426 = vand.u32 %v1824, 4294901760
  %v2427 = vsub.f32 %v1824, %v2426
  %2428 = vmatmul.mubr.f32.gmra.mxu0 %v2427
  %v2429 = vpop.f32.mrf.mxu0
  %v2430 = vadd.f32 %v2245, %v2429
  %v2431 = vpop.f32.mrf.mxu0
  %2432 = vdwg.mxu0
  %2433 = vmatprep.subr.mxu0 0.0
  %2434 = vmatpush1.xpose.msra.mxu0 0.0
  %2435 = vmatprep.subr.mxu0 0.0
  %2436 = vmatpush1.xpose.msra.mxu0 0.0
  %2437 = vmatprep.subr.mxu0 0.0
  %2438 = vmatpush1.xpose.msra.mxu0 0.0
  %2439 = vmatprep.subr.mxu0 0.0
  %2440 = vmatpush1.xpose.msra.mxu0 0.0
  %2441 = vmatprep.subr.mxu0 0.0
  %2442 = vmatpush1.xpose.msra.mxu0 0.0
  %2443 = vmatprep.subr.mxu0 0.0
  %2444 = vmatpush1.xpose.msra.mxu0 0.0
  %2445 = vmatprep.subr.mxu0 0.0
  %2446 = vmatpush1.xpose.msra.mxu0 0.0
  %2447 = vmatprep.subr.mxu0 0.0
  %2448 = vmatpush1.xpose.msra.mxu0 0.0
  %2449 = vmatprep.subr.mxu0 0.0
  %2450 = vmatpush1.xpose.msra.mxu0 0.0
  %2451 = vmatprep.subr.mxu0 0.0
  %2452 = vmatpush1.xpose.msra.mxu0 0.0
  %2453 = vmatprep.subr.mxu0 0.0
  %2454 = vmatpush1.xpose.msra.mxu0 0.0
  %2455 = vmatprep.subr.mxu0 0.0
  %2456 = vmatpush1.xpose.msra.mxu0 0.0
  %2457 = vmatprep.subr.mxu0 0.0
  %v2458 = vand.u32 %v1836, 4294901760
  %2459 = vmatpush1.xpose.msra.mxu0 %v2458
  %2460 = vmatprep.subr.mxu0 0.0
  %v2461 = vand.u32 %v1833, 4294901760
  %2462 = vmatpush1.xpose.msra.mxu0 %v2461
  %2463 = vmatprep.subr.mxu0 0.0
  %v2464 = vand.u32 %v1830, 4294901760
  %2465 = vmatpush1.xpose.msra.mxu0 %v2464
  %2466 = vmatprep.subr.mxu0 0.0
  %v2467 = vand.u32 %v1827, 4294901760
  %2468 = vmatpush1.xpose.msra.mxu0 %v2467
  %2469 = vmatprep.subr.mxu0 0.0
  %2470 = vmatpush2.xpose.msra.mxu0 0.0
  %2471 = vmatprep.subr.mxu0 0.0
  %2472 = vmatpush2.xpose.msra.mxu0 0.0
  %2473 = vmatprep.subr.mxu0 0.0
  %2474 = vmatpush2.xpose.msra.mxu0 0.0
  %2475 = vmatprep.subr.mxu0 0.0
  %2476 = vmatpush2.xpose.msra.mxu0 0.0
  %2477 = vmatprep.subr.mxu0 0.0
  %2478 = vmatpush2.xpose.msra.mxu0 0.0
  %2479 = vmatprep.subr.mxu0 0.0
  %2480 = vmatpush2.xpose.msra.mxu0 0.0
  %2481 = vmatprep.subr.mxu0 0.0
  %2482 = vmatpush2.xpose.msra.mxu0 0.0
  %2483 = vmatprep.subr.mxu0 0.0
  %2484 = vmatpush2.xpose.msra.mxu0 0.0
  %2485 = vmatprep.subr.mxu0 0.0
  %2486 = vmatpush2.xpose.msra.mxu0 0.0
  %2487 = vmatprep.subr.mxu0 0.0
  %2488 = vmatpush2.xpose.msra.mxu0 0.0
  %2489 = vmatprep.subr.mxu0 0.0
  %2490 = vmatpush2.xpose.msra.mxu0 0.0
  %2491 = vmatprep.subr.mxu0 0.0
  %2492 = vmatpush2.xpose.msra.mxu0 0.0
  %2493 = vmatprep.subr.mxu0 0.0
  %2494 = vmatpush2.xpose.msra.mxu0 0.0
  %2495 = vmatprep.subr.mxu0 0.0
  %2496 = vmatpush2.xpose.msra.mxu0 0.0
  %2497 = vmatprep.subr.mxu0 0.0
  %2498 = vmatpush2.xpose.msra.mxu0 0.0
  %2499 = vmatprep.subr.mxu0 0.0
  %2500 = vmatpush2.xpose.msra.mxu0 0.0
  %2501 = vmatprep.mubr.f32.mxu0 0.0
  %v2502 = vand.u32 %v1779, 4294901760
  %v2503 = vsub.f32 %v1779, %v2502
  %v2504 = vand.u32 %v2503, 4294901760
  %2505 = vmatmul.mubr.f32.gmra.mxu0 %v2504
  %v2506 = vpop.f32.mrf.mxu0
  %v2507 = vadd.f32 %v2325, %v2506
  %v2508 = vpop.f32.mrf.mxu0
  %2509 = vmatprep.mubr.f32.mxu0 0.0
  %v2510 = vand.u32 %v1782, 4294901760
  %v2511 = vsub.f32 %v1782, %v2510
  %v2512 = vand.u32 %v2511, 4294901760
  %2513 = vmatmul.mubr.f32.gmra.mxu0 %v2512
  %v2514 = vpop.f32.mrf.mxu0
  %v2515 = vadd.f32 %v2332, %v2514
  %v2516 = vpop.f32.mrf.mxu0
  %2517 = vmatprep.mubr.f32.mxu0 0.0
  %v2518 = vand.u32 %v1785, 4294901760
  %v2519 = vsub.f32 %v1785, %v2518
  %v2520 = vand.u32 %v2519, 4294901760
  %2521 = vmatmul.mubr.f32.gmra.mxu0 %v2520
  %v2522 = vpop.f32.mrf.mxu0
  %v2523 = vadd.f32 %v2339, %v2522
  %v2524 = vpop.f32.mrf.mxu0
  %2525 = vmatprep.mubr.f32.mxu0 0.0
  %v2526 = vand.u32 %v1788, 4294901760
  %v2527 = vsub.f32 %v1788, %v2526
  %v2528 = vand.u32 %v2527, 4294901760
  %2529 = vmatmul.mubr.f32.gmra.mxu0 %v2528
  %v2530 = vpop.f32.mrf.mxu0
  %v2531 = vadd.f32 %v2346, %v2530
  %v2532 = vpop.f32.mrf.mxu0
  %2533 = vmatprep.mubr.f32.mxu0 0.0
  %v2534 = vand.u32 %v1791, 4294901760
  %v2535 = vsub.f32 %v1791, %v2534
  %v2536 = vand.u32 %v2535, 4294901760
  %2537 = vmatmul.mubr.f32.gmra.mxu0 %v2536
  %v2538 = vpop.f32.mrf.mxu0
  %v2539 = vadd.f32 %v2353, %v2538
  %v2540 = vpop.f32.mrf.mxu0
  %2541 = vmatprep.mubr.f32.mxu0 0.0
  %v2542 = vand.u32 %v1794, 4294901760
  %v2543 = vsub.f32 %v1794, %v2542
  %v2544 = vand.u32 %v2543, 4294901760
  %2545 = vmatmul.mubr.f32.gmra.mxu0 %v2544
  %v2546 = vpop.f32.mrf.mxu0
  %v2547 = vadd.f32 %v2360, %v2546
  %v2548 = vpop.f32.mrf.mxu0
  %2549 = vmatprep.mubr.f32.mxu0 0.0
  %v2550 = vand.u32 %v1797, 4294901760
  %v2551 = vsub.f32 %v1797, %v2550
  %v2552 = vand.u32 %v2551, 4294901760
  %2553 = vmatmul.mubr.f32.gmra.mxu0 %v2552
  %v2554 = vpop.f32.mrf.mxu0
  %v2555 = vadd.f32 %v2367, %v2554
  %v2556 = vpop.f32.mrf.mxu0
  %2557 = vmatprep.mubr.f32.mxu0 0.0
  %v2558 = vand.u32 %v1800, 4294901760
  %v2559 = vsub.f32 %v1800, %v2558
  %v2560 = vand.u32 %v2559, 4294901760
  %2561 = vmatmul.mubr.f32.gmra.mxu0 %v2560
  %v2562 = vpop.f32.mrf.mxu0
  %v2563 = vadd.f32 %v2374, %v2562
  %v2564 = vpop.f32.mrf.mxu0
  %2565 = vmatprep.mubr.f32.mxu0 0.0
  %v2566 = vand.u32 %v1803, 4294901760
  %v2567 = vsub.f32 %v1803, %v2566
  %v2568 = vand.u32 %v2567, 4294901760
  %2569 = vmatmul.mubr.f32.gmra.mxu0 %v2568
  %v2570 = vpop.f32.mrf.mxu0
  %v2571 = vadd.f32 %v2381, %v2570
  %v2572 = vpop.f32.mrf.mxu0
  %2573 = vmatprep.mubr.f32.mxu0 0.0
  %v2574 = vand.u32 %v1806, 4294901760
  %v2575 = vsub.f32 %v1806, %v2574
  %v2576 = vand.u32 %v2575, 4294901760
  %2577 = vmatmul.mubr.f32.gmra.mxu0 %v2576
  %v2578 = vpop.f32.mrf.mxu0
  %v2579 = vadd.f32 %v2388, %v2578
  %v2580 = vpop.f32.mrf.mxu0
  %2581 = vmatprep.mubr.f32.mxu0 0.0
  %v2582 = vand.u32 %v1809, 4294901760
  %v2583 = vsub.f32 %v1809, %v2582
  %v2584 = vand.u32 %v2583, 4294901760
  %2585 = vmatmul.mubr.f32.gmra.mxu0 %v2584
  %v2586 = vpop.f32.mrf.mxu0
  %v2587 = vadd.f32 %v2395, %v2586
  %v2588 = vpop.f32.mrf.mxu0
  %2589 = vmatprep.mubr.f32.mxu0 0.0
  %v2590 = vand.u32 %v1812, 4294901760
  %v2591 = vsub.f32 %v1812, %v2590
  %v2592 = vand.u32 %v2591, 4294901760
  %2593 = vmatmul.mubr.f32.gmra.mxu0 %v2592
  %v2594 = vpop.f32.mrf.mxu0
  %v2595 = vadd.f32 %v2402, %v2594
  %v2596 = vpop.f32.mrf.mxu0
  %2597 = vmatprep.mubr.f32.mxu0 0.0
  %v2598 = vand.u32 %v1815, 4294901760
  %v2599 = vsub.f32 %v1815, %v2598
  %v2600 = vand.u32 %v2599, 4294901760
  %2601 = vmatmul.mubr.f32.gmra.mxu0 %v2600
  %v2602 = vpop.f32.mrf.mxu0
  %v2603 = vadd.f32 %v2409, %v2602
  %v2604 = vpop.f32.mrf.mxu0
  %2605 = vmatprep.mubr.f32.mxu0 0.0
  %v2606 = vand.u32 %v1818, 4294901760
  %v2607 = vsub.f32 %v1818, %v2606
  %v2608 = vand.u32 %v2607, 4294901760
  %2609 = vmatmul.mubr.f32.gmra.mxu0 %v2608
  %v2610 = vpop.f32.mrf.mxu0
  %v2611 = vadd.f32 %v2416, %v2610
  %v2612 = vpop.f32.mrf.mxu0
  %2613 = vmatprep.mubr.f32.mxu0 0.0
  %v2614 = vand.u32 %v1821, 4294901760
  %v2615 = vsub.f32 %v1821, %v2614
  %v2616 = vand.u32 %v2615, 4294901760
  %2617 = vmatmul.mubr.f32.gmra.mxu0 %v2616
  %v2618 = vpop.f32.mrf.mxu0
  %v2619 = vadd.f32 %v2423, %v2618
  %v2620 = vpop.f32.mrf.mxu0
  %2621 = vmatprep.mubr.f32.mxu0 0.0
  %v2622 = vand.u32 %v1824, 4294901760
  %v2623 = vsub.f32 %v1824, %v2622
  %v2624 = vand.u32 %v2623, 4294901760
  %2625 = vmatmul.mubr.f32.gmra.mxu0 %v2624
  %v2626 = vpop.f32.mrf.mxu0
  %v2627 = vadd.f32 %v2430, %v2626
  %v2628 = vpop.f32.mrf.mxu0
  %2629 = vdwg.mxu0
  %2630 = vmatprep.subr.mxu0 0.0
  %2631 = vmatpush1.xpose.msra.mxu0 0.0
  %2632 = vmatprep.subr.mxu0 0.0
  %2633 = vmatpush1.xpose.msra.mxu0 0.0
  %2634 = vmatprep.subr.mxu0 0.0
  %2635 = vmatpush1.xpose.msra.mxu0 0.0
  %2636 = vmatprep.subr.mxu0 0.0
  %2637 = vmatpush1.xpose.msra.mxu0 0.0
  %2638 = vmatprep.subr.mxu0 0.0
  %2639 = vmatpush1.xpose.msra.mxu0 0.0
  %2640 = vmatprep.subr.mxu0 0.0
  %2641 = vmatpush1.xpose.msra.mxu0 0.0
  %2642 = vmatprep.subr.mxu0 0.0
  %2643 = vmatpush1.xpose.msra.mxu0 0.0
  %2644 = vmatprep.subr.mxu0 0.0
  %2645 = vmatpush1.xpose.msra.mxu0 0.0
  %2646 = vmatprep.subr.mxu0 0.0
  %2647 = vmatpush1.xpose.msra.mxu0 0.0
  %2648 = vmatprep.subr.mxu0 0.0
  %2649 = vmatpush1.xpose.msra.mxu0 0.0
  %2650 = vmatprep.subr.mxu0 0.0
  %2651 = vmatpush1.xpose.msra.mxu0 0.0
  %2652 = vmatprep.subr.mxu0 0.0
  %2653 = vmatpush1.xpose.msra.mxu0 0.0
  %2654 = vmatprep.subr.mxu0 0.0
  %v2655 = vand.u32 %v1836, 4294901760
  %v2656 = vsub.f32 %v1836, %v2655
  %v2657 = vand.u32 %v2656, 4294901760
  %2658 = vmatpush1.xpose.msra.mxu0 %v2657
  %2659 = vmatprep.subr.mxu0 0.0
  %v2660 = vand.u32 %v1833, 4294901760
  %v2661 = vsub.f32 %v1833, %v2660
  %v2662 = vand.u32 %v2661, 4294901760
  %2663 = vmatpush1.xpose.msra.mxu0 %v2662
  %2664 = vmatprep.subr.mxu0 0.0
  %v2665 = vand.u32 %v1830, 4294901760
  %v2666 = vsub.f32 %v1830, %v2665
  %v2667 = vand.u32 %v2666, 4294901760
  %2668 = vmatpush1.xpose.msra.mxu0 %v2667
  %2669 = vmatprep.subr.mxu0 0.0
  %v2670 = vand.u32 %v1827, 4294901760
  %v2671 = vsub.f32 %v1827, %v2670
  %v2672 = vand.u32 %v2671, 4294901760
  %2673 = vmatpush1.xpose.msra.mxu0 %v2672
  %2674 = vmatprep.subr.mxu0 0.0
  %2675 = vmatpush2.xpose.msra.mxu0 0.0
  %2676 = vmatprep.subr.mxu0 0.0
  %2677 = vmatpush2.xpose.msra.mxu0 0.0
  %2678 = vmatprep.subr.mxu0 0.0
  %2679 = vmatpush2.xpose.msra.mxu0 0.0
  %2680 = vmatprep.subr.mxu0 0.0
  %2681 = vmatpush2.xpose.msra.mxu0 0.0
  %2682 = vmatprep.subr.mxu0 0.0
  %2683 = vmatpush2.xpose.msra.mxu0 0.0
  %2684 = vmatprep.subr.mxu0 0.0
  %2685 = vmatpush2.xpose.msra.mxu0 0.0
  %2686 = vmatprep.subr.mxu0 0.0
  %2687 = vmatpush2.xpose.msra.mxu0 0.0
  %2688 = vmatprep.subr.mxu0 0.0
  %2689 = vmatpush2.xpose.msra.mxu0 0.0
  %2690 = vmatprep.subr.mxu0 0.0
  %2691 = vmatpush2.xpose.msra.mxu0 0.0
  %2692 = vmatprep.subr.mxu0 0.0
  %2693 = vmatpush2.xpose.msra.mxu0 0.0
  %2694 = vmatprep.subr.mxu0 0.0
  %2695 = vmatpush2.xpose.msra.mxu0 0.0
  %2696 = vmatprep.subr.mxu0 0.0
  %2697 = vmatpush2.xpose.msra.mxu0 0.0
  %2698 = vmatprep.subr.mxu0 0.0
  %2699 = vmatpush2.xpose.msra.mxu0 0.0
  %2700 = vmatprep.subr.mxu0 0.0
  %2701 = vmatpush2.xpose.msra.mxu0 0.0
  %2702 = vmatprep.subr.mxu0 0.0
  %2703 = vmatpush2.xpose.msra.mxu0 0.0
  %2704 = vmatprep.subr.mxu0 0.0
  %2705 = vmatpush2.xpose.msra.mxu0 0.0
  %2706 = vmatprep.mubr.f32.mxu0 0.0
  %v2707 = vand.u32 %v1779, 4294901760
  %2708 = vmatmul.mubr.f32.gmra.mxu0 %v2707
  %v2709 = vpop.f32.mrf.mxu0
  %v2710 = vadd.f32 %v2507, %v2709
  %v2711 = vpop.f32.mrf.mxu0
  %2712 = vmatprep.mubr.f32.mxu0 0.0
  %v2713 = vand.u32 %v1782, 4294901760
  %2714 = vmatmul.mubr.f32.gmra.mxu0 %v2713
  %v2715 = vpop.f32.mrf.mxu0
  %v2716 = vadd.f32 %v2515, %v2715
  %v2717 = vpop.f32.mrf.mxu0
  %2718 = vmatprep.mubr.f32.mxu0 0.0
  %v2719 = vand.u32 %v1785, 4294901760
  %2720 = vmatmul.mubr.f32.gmra.mxu0 %v2719
  %v2721 = vpop.f32.mrf.mxu0
  %v2722 = vadd.f32 %v2523, %v2721
  %v2723 = vpop.f32.mrf.mxu0
  %2724 = vmatprep.mubr.f32.mxu0 0.0
  %v2725 = vand.u32 %v1788, 4294901760
  %2726 = vmatmul.mubr.f32.gmra.mxu0 %v2725
  %v2727 = vpop.f32.mrf.mxu0
  %v2728 = vadd.f32 %v2531, %v2727
  %v2729 = vpop.f32.mrf.mxu0
  %2730 = vmatprep.mubr.f32.mxu0 0.0
  %v2731 = vand.u32 %v1791, 4294901760
  %2732 = vmatmul.mubr.f32.gmra.mxu0 %v2731
  %v2733 = vpop.f32.mrf.mxu0
  %v2734 = vadd.f32 %v2539, %v2733
  %v2735 = vpop.f32.mrf.mxu0
  %2736 = vmatprep.mubr.f32.mxu0 0.0
  %v2737 = vand.u32 %v1794, 4294901760
  %2738 = vmatmul.mubr.f32.gmra.mxu0 %v2737
  %v2739 = vpop.f32.mrf.mxu0
  %v2740 = vadd.f32 %v2547, %v2739
  %v2741 = vpop.f32.mrf.mxu0
  %2742 = vmatprep.mubr.f32.mxu0 0.0
  %v2743 = vand.u32 %v1797, 4294901760
  %2744 = vmatmul.mubr.f32.gmra.mxu0 %v2743
  %v2745 = vpop.f32.mrf.mxu0
  %v2746 = vadd.f32 %v2555, %v2745
  %v2747 = vpop.f32.mrf.mxu0
  %2748 = vmatprep.mubr.f32.mxu0 0.0
  %v2749 = vand.u32 %v1800, 4294901760
  %2750 = vmatmul.mubr.f32.gmra.mxu0 %v2749
  %v2751 = vpop.f32.mrf.mxu0
  %v2752 = vadd.f32 %v2563, %v2751
  %v2753 = vpop.f32.mrf.mxu0
  %2754 = vmatprep.mubr.f32.mxu0 0.0
  %v2755 = vand.u32 %v1803, 4294901760
  %2756 = vmatmul.mubr.f32.gmra.mxu0 %v2755
  %v2757 = vpop.f32.mrf.mxu0
  %v2758 = vadd.f32 %v2571, %v2757
  %v2759 = vpop.f32.mrf.mxu0
  %2760 = vmatprep.mubr.f32.mxu0 0.0
  %v2761 = vand.u32 %v1806, 4294901760
  %2762 = vmatmul.mubr.f32.gmra.mxu0 %v2761
  %v2763 = vpop.f32.mrf.mxu0
  %v2764 = vadd.f32 %v2579, %v2763
  %v2765 = vpop.f32.mrf.mxu0
  %2766 = vmatprep.mubr.f32.mxu0 0.0
  %v2767 = vand.u32 %v1809, 4294901760
  %2768 = vmatmul.mubr.f32.gmra.mxu0 %v2767
  %v2769 = vpop.f32.mrf.mxu0
  %v2770 = vadd.f32 %v2587, %v2769
  %v2771 = vpop.f32.mrf.mxu0
  %2772 = vmatprep.mubr.f32.mxu0 0.0
  %v2773 = vand.u32 %v1812, 4294901760
  %2774 = vmatmul.mubr.f32.gmra.mxu0 %v2773
  %v2775 = vpop.f32.mrf.mxu0
  %v2776 = vadd.f32 %v2595, %v2775
  %v2777 = vpop.f32.mrf.mxu0
  %2778 = vmatprep.mubr.f32.mxu0 0.0
  %v2779 = vand.u32 %v1815, 4294901760
  %2780 = vmatmul.mubr.f32.gmra.mxu0 %v2779
  %v2781 = vpop.f32.mrf.mxu0
  %v2782 = vadd.f32 %v2603, %v2781
  %v2783 = vpop.f32.mrf.mxu0
  %2784 = vmatprep.mubr.f32.mxu0 0.0
  %v2785 = vand.u32 %v1818, 4294901760
  %2786 = vmatmul.mubr.f32.gmra.mxu0 %v2785
  %v2787 = vpop.f32.mrf.mxu0
  %v2788 = vadd.f32 %v2611, %v2787
  %v2789 = vpop.f32.mrf.mxu0
  %2790 = vmatprep.mubr.f32.mxu0 0.0
  %v2791 = vand.u32 %v1821, 4294901760
  %2792 = vmatmul.mubr.f32.gmra.mxu0 %v2791
  %v2793 = vpop.f32.mrf.mxu0
  %v2794 = vadd.f32 %v2619, %v2793
  %v2795 = vpop.f32.mrf.mxu0
  %2796 = vmatprep.mubr.f32.mxu0 0.0
  %v2797 = vand.u32 %v1824, 4294901760
  %2798 = vmatmul.mubr.f32.gmra.mxu0 %v2797
  %v2799 = vpop.f32.mrf.mxu0
  %v2800 = vadd.f32 %v2627, %v2799
  %v2801 = vpop.f32.mrf.mxu0
  %2802 = vdwg.mxu0
  %2803 = vmatprep.subr.mxu0 0.0
  %2804 = vmatpush1.xpose.msra.mxu0 0.0
  %2805 = vmatprep.subr.mxu0 0.0
  %2806 = vmatpush1.xpose.msra.mxu0 0.0
  %2807 = vmatprep.subr.mxu0 0.0
  %2808 = vmatpush1.xpose.msra.mxu0 0.0
  %2809 = vmatprep.subr.mxu0 0.0
  %2810 = vmatpush1.xpose.msra.mxu0 0.0
  %2811 = vmatprep.subr.mxu0 0.0
  %2812 = vmatpush1.xpose.msra.mxu0 0.0
  %2813 = vmatprep.subr.mxu0 0.0
  %2814 = vmatpush1.xpose.msra.mxu0 0.0
  %2815 = vmatprep.subr.mxu0 0.0
  %2816 = vmatpush1.xpose.msra.mxu0 0.0
  %2817 = vmatprep.subr.mxu0 0.0
  %2818 = vmatpush1.xpose.msra.mxu0 0.0
  %2819 = vmatprep.subr.mxu0 0.0
  %2820 = vmatpush1.xpose.msra.mxu0 0.0
  %2821 = vmatprep.subr.mxu0 0.0
  %2822 = vmatpush1.xpose.msra.mxu0 0.0
  %2823 = vmatprep.subr.mxu0 0.0
  %2824 = vmatpush1.xpose.msra.mxu0 0.0
  %2825 = vmatprep.subr.mxu0 0.0
  %2826 = vmatpush1.xpose.msra.mxu0 0.0
  %2827 = vmatprep.subr.mxu0 0.0
  %v2828 = vand.u32 %v1836, 4294901760
  %2829 = vmatpush1.xpose.msra.mxu0 %v2828
  %2830 = vmatprep.subr.mxu0 0.0
  %v2831 = vand.u32 %v1833, 4294901760
  %2832 = vmatpush1.xpose.msra.mxu0 %v2831
  %2833 = vmatprep.subr.mxu0 0.0
  %v2834 = vand.u32 %v1830, 4294901760
  %2835 = vmatpush1.xpose.msra.mxu0 %v2834
  %2836 = vmatprep.subr.mxu0 0.0
  %v2837 = vand.u32 %v1827, 4294901760
  %2838 = vmatpush1.xpose.msra.mxu0 %v2837
  %2839 = vmatprep.subr.mxu0 0.0
  %2840 = vmatpush2.xpose.msra.mxu0 0.0
  %2841 = vmatprep.subr.mxu0 0.0
  %2842 = vmatpush2.xpose.msra.mxu0 0.0
  %2843 = vmatprep.subr.mxu0 0.0
  %2844 = vmatpush2.xpose.msra.mxu0 0.0
  %2845 = vmatprep.subr.mxu0 0.0
  %2846 = vmatpush2.xpose.msra.mxu0 0.0
  %2847 = vmatprep.subr.mxu0 0.0
  %2848 = vmatpush2.xpose.msra.mxu0 0.0
  %2849 = vmatprep.subr.mxu0 0.0
  %2850 = vmatpush2.xpose.msra.mxu0 0.0
  %2851 = vmatprep.subr.mxu0 0.0
  %2852 = vmatpush2.xpose.msra.mxu0 0.0
  %2853 = vmatprep.subr.mxu0 0.0
  %2854 = vmatpush2.xpose.msra.mxu0 0.0
  %2855 = vmatprep.subr.mxu0 0.0
  %2856 = vmatpush2.xpose.msra.mxu0 0.0
  %2857 = vmatprep.subr.mxu0 0.0
  %2858 = vmatpush2.xpose.msra.mxu0 0.0
  %2859 = vmatprep.subr.mxu0 0.0
  %2860 = vmatpush2.xpose.msra.mxu0 0.0
  %2861 = vmatprep.subr.mxu0 0.0
  %2862 = vmatpush2.xpose.msra.mxu0 0.0
  %2863 = vmatprep.subr.mxu0 0.0
  %2864 = vmatpush2.xpose.msra.mxu0 0.0
  %2865 = vmatprep.subr.mxu0 0.0
  %2866 = vmatpush2.xpose.msra.mxu0 0.0
  %2867 = vmatprep.subr.mxu0 0.0
  %2868 = vmatpush2.xpose.msra.mxu0 0.0
  %2869 = vmatprep.subr.mxu0 0.0
  %2870 = vmatpush2.xpose.msra.mxu0 0.0
  %2871 = vmatprep.mubr.f32.mxu0 0.0
  %v2872 = vand.u32 %v1779, 4294901760
  %2873 = vmatmul.mubr.f32.gmra.mxu0 %v2872
  %v2874 = vpop.f32.mrf.mxu0
  %v2875 = vadd.f32 %v2710, %v2874
  %v2876 = vpop.f32.mrf.mxu0
  %2877 = vmatprep.mubr.f32.mxu0 0.0
  %v2878 = vand.u32 %v1782, 4294901760
  %2879 = vmatmul.mubr.f32.gmra.mxu0 %v2878
  %v2880 = vpop.f32.mrf.mxu0
  %v2881 = vadd.f32 %v2716, %v2880
  %v2882 = vpop.f32.mrf.mxu0
  %2883 = vmatprep.mubr.f32.mxu0 0.0
  %v2884 = vand.u32 %v1785, 4294901760
  %2885 = vmatmul.mubr.f32.gmra.mxu0 %v2884
  %v2886 = vpop.f32.mrf.mxu0
  %v2887 = vadd.f32 %v2722, %v2886
  %v2888 = vpop.f32.mrf.mxu0
  %2889 = vmatprep.mubr.f32.mxu0 0.0
  %v2890 = vand.u32 %v1788, 4294901760
  %2891 = vmatmul.mubr.f32.gmra.mxu0 %v2890
  %v2892 = vpop.f32.mrf.mxu0
  %v2893 = vadd.f32 %v2728, %v2892
  %v2894 = vpop.f32.mrf.mxu0
  %2895 = vmatprep.mubr.f32.mxu0 0.0
  %v2896 = vand.u32 %v1791, 4294901760
  %2897 = vmatmul.mubr.f32.gmra.mxu0 %v2896
  %v2898 = vpop.f32.mrf.mxu0
  %v2899 = vadd.f32 %v2734, %v2898
  %v2900 = vpop.f32.mrf.mxu0
  %2901 = vmatprep.mubr.f32.mxu0 0.0
  %v2902 = vand.u32 %v1794, 4294901760
  %2903 = vmatmul.mubr.f32.gmra.mxu0 %v2902
  %v2904 = vpop.f32.mrf.mxu0
  %v2905 = vadd.f32 %v2740, %v2904
  %v2906 = vpop.f32.mrf.mxu0
  %2907 = vmatprep.mubr.f32.mxu0 0.0
  %v2908 = vand.u32 %v1797, 4294901760
  %2909 = vmatmul.mubr.f32.gmra.mxu0 %v2908
  %v2910 = vpop.f32.mrf.mxu0
  %v2911 = vadd.f32 %v2746, %v2910
  %v2912 = vpop.f32.mrf.mxu0
  %2913 = vmatprep.mubr.f32.mxu0 0.0
  %v2914 = vand.u32 %v1800, 4294901760
  %2915 = vmatmul.mubr.f32.gmra.mxu0 %v2914
  %v2916 = vpop.f32.mrf.mxu0
  %v2917 = vadd.f32 %v2752, %v2916
  %v2918 = vpop.f32.mrf.mxu0
  %2919 = vmatprep.mubr.f32.mxu0 0.0
  %v2920 = vand.u32 %v1803, 4294901760
  %2921 = vmatmul.mubr.f32.gmra.mxu0 %v2920
  %v2922 = vpop.f32.mrf.mxu0
  %v2923 = vadd.f32 %v2758, %v2922
  %v2924 = vpop.f32.mrf.mxu0
  %2925 = vmatprep.mubr.f32.mxu0 0.0
  %v2926 = vand.u32 %v1806, 4294901760
  %2927 = vmatmul.mubr.f32.gmra.mxu0 %v2926
  %v2928 = vpop.f32.mrf.mxu0
  %v2929 = vadd.f32 %v2764, %v2928
  %v2930 = vpop.f32.mrf.mxu0
  %2931 = vmatprep.mubr.f32.mxu0 0.0
  %v2932 = vand.u32 %v1809, 4294901760
  %2933 = vmatmul.mubr.f32.gmra.mxu0 %v2932
  %v2934 = vpop.f32.mrf.mxu0
  %v2935 = vadd.f32 %v2770, %v2934
  %v2936 = vpop.f32.mrf.mxu0
  %2937 = vmatprep.mubr.f32.mxu0 0.0
  %v2938 = vand.u32 %v1812, 4294901760
  %2939 = vmatmul.mubr.f32.gmra.mxu0 %v2938
  %v2940 = vpop.f32.mrf.mxu0
  %v2941 = vadd.f32 %v2776, %v2940
  %v2942 = vpop.f32.mrf.mxu0
  %2943 = vmatprep.mubr.f32.mxu0 0.0
  %v2944 = vand.u32 %v1815, 4294901760
  %2945 = vmatmul.mubr.f32.gmra.mxu0 %v2944
  %v2946 = vpop.f32.mrf.mxu0
  %v2947 = vadd.f32 %v2782, %v2946
  %v2948 = vpop.f32.mrf.mxu0
  %2949 = vmatprep.mubr.f32.mxu0 0.0
  %v2950 = vand.u32 %v1818, 4294901760
  %2951 = vmatmul.mubr.f32.gmra.mxu0 %v2950
  %v2952 = vpop.f32.mrf.mxu0
  %v2953 = vadd.f32 %v2788, %v2952
  %v2954 = vpop.f32.mrf.mxu0
  %2955 = vmatprep.mubr.f32.mxu0 0.0
  %v2956 = vand.u32 %v1821, 4294901760
  %2957 = vmatmul.mubr.f32.gmra.mxu0 %v2956
  %v2958 = vpop.f32.mrf.mxu0
  %v2959 = vadd.f32 %v2794, %v2958
  %v2960 = vpop.f32.mrf.mxu0
  %2961 = vmatprep.mubr.f32.mxu0 0.0
  %v2962 = vand.u32 %v1824, 4294901760
  %2963 = vmatmul.mubr.f32.gmra.mxu0 %v2962
  %v2964 = vpop.f32.mrf.mxu0
  %v2965 = vadd.f32 %v2800, %v2964
  %v2966 = vpop.f32.mrf.mxu0
  %2967 = vdwg.mxu0
  %2968 = vst.msk [vmem:[%s7] sm:$0xff] %vm1777, %v2875
  %2969 = vst.msk [vmem:[%s7 + $0x8] sm:$0xff] %vm1777, %v2881
  %2970 = vst.msk [vmem:[%s7 + $0x10] sm:$0xff] %vm1777, %v2887
  %2971 = vst.msk [vmem:[%s7 + $0x18] sm:$0xff] %vm1777, %v2893
  %2972 = vst.msk [vmem:[%s7 + $0x20] sm:$0xff] %vm1777, %v2899
  %2973 = vst.msk [vmem:[%s7 + $0x28] sm:$0xff] %vm1777, %v2905
  %2974 = vst.msk [vmem:[%s7 + $0x30] sm:$0xff] %vm1777, %v2911
  %2975 = vst.msk [vmem:[%s7 + $0x38] sm:$0xff] %vm1777, %v2917
  %2976 = vst.msk [vmem:[%s7 + $0x40] sm:$0xff] %vm1777, %v2923
  %2977 = vst.msk [vmem:[%s7 + $0x48] sm:$0xff] %vm1777, %v2929
  %2978 = vst.msk [vmem:[%s7 + $0x50] sm:$0xff] %vm1777, %v2935
  %2979 = vst.msk [vmem:[%s7 + $0x58] sm:$0xff] %vm1777, %v2941
  %2980 = vst.msk [vmem:[%s7 + $0x60] sm:$0xff] %vm1777, %v2947
  %2981 = vst.msk [vmem:[%s7 + $0x68] sm:$0xff] %vm1777, %v2953
  %2982 = vst.msk [vmem:[%s7 + $0x70] sm:$0xff] %vm1777, %v2959
  %2983 = vst.msk [vmem:[%s7 + $0x78] sm:$0xff] %vm1777, %v2965
  // Predicated region
  $region30: #{tpu_custom_call.1} parent=0 // pred_check
    _
  $region31: #{tpu_custom_call.1} parent=0 // pred_check_branch
    %2985 = sbr.rel (0) target = $region33
  $region32: #{tpu_custom_call.1} parent=0 // pred_region
    _
  $region33: #{tpu_custom_call.1} parent=0 // pred_fallthru
    _
  // Predicated region
  $region34: #{tpu_custom_call.1} parent=0 // pred_check
    _
  $region35: #{tpu_custom_call.1} parent=0 // pred_check_branch
    %2987 = sbr.rel (0) target = $region37
  $region36: #{tpu_custom_call.1} parent=0 // pred_region
    _
  $region37: #{tpu_custom_call.1} parent=0 // pred_fallthru
    _

</llo_original>
